<compile_context>
chip_gen: v6e
topology: v6e:2x2x1
jax: 0.10.0
libtpu: 0.0.40
codegen_flags: <defaults>
</compile_context>

<pallas_src>
import functools

import jax
import jax.numpy as jnp
from jax.experimental import pallas as pl
from jax.experimental.pallas import tpu as pltpu


# ----------------------------------------------------------------------------
# Kernel
# ----------------------------------------------------------------------------
def _layer_norm(x, w, b, eps=1e-5):
    mu = jnp.mean(x, axis=-1, keepdims=True)
    xc = x - mu
    var = jnp.mean(xc * xc, axis=-1, keepdims=True)
    return xc * jax.lax.rsqrt(var + eps) * w + b


def _clip_stack_kernel(x_ref, mask_ref,
                       ln1w_ref, ln1b_ref, wqkv_ref, bqkv_ref, wo_ref, bo_ref,
                       ln2w_ref, ln2b_ref, w1_ref, b1_ref, w2_ref, b2_ref,
                       o_ref, *, nheads, normalize):
    """One grid step == one CLIP ResidualAttentionBlock on the full (B,S,D)
    residual stream, carried in the resident output block across layers."""
    layer = pl.program_id(0)
    nlayers = pl.num_programs(0)

    B, S, D = o_ref.shape
    H = nheads
    dh = D // H
    scale = 1.0 / float(dh) ** 0.5

    # ---- layer 0: seed the resident residual stream (token+pos emb from XLA)
    @pl.when(layer == 0)
    def _():
        o_ref[...] = x_ref[...]

    x = o_ref[...]                                        # (B, S, D) f32

    ln1w = ln1w_ref[0]                                    # (1, D)   f32
    ln1b = ln1b_ref[0]
    ln2w = ln2w_ref[0]
    ln2b = ln2b_ref[0]
    wqkv = wqkv_ref[0]                                    # (D, 3D)  bf16
    bqkv = bqkv_ref[0]                                    # (1, 3D)  f32
    wo = wo_ref[0]                                        # (D, D)   bf16
    bo = bo_ref[0]                                        # (1, D)   f32
    w1 = w1_ref[0]                                        # (D, F)   bf16
    b1 = b1_ref[0]                                        # (1, F)   f32
    w2 = w2_ref[0]                                        # (F, D)   bf16
    b2 = b2_ref[0]                                        # (1, D)   f32
    causal = mask_ref[...]                                # (S, S)   f32, hoisted

    # ---- Multi-head self-attention (pre-LN, causal) ----
    xn = _layer_norm(x, ln1w, ln1b).reshape(B * S, D).astype(jnp.bfloat16)

    # Fused QKV projection: one full-width MXU pass (M=B*S, K=D, N=3D).
    qkv = jnp.dot(xn, wqkv, preferred_element_type=jnp.float32) + bqkv  # (B*S, 3D)

    q = (qkv[:, 0:D] * scale).astype(jnp.bfloat16).reshape(B, S, D)
    k = qkv[:, D:2 * D].astype(jnp.bfloat16).reshape(B, S, D)
    v = qkv[:, 2 * D:3 * D].astype(jnp.bfloat16).reshape(B, S, D)

    def to_heads(t):
        # (B, S, D) -> (H*B, S, dh) via static lane slices + stack
        # (layout plumbing only; no transposes, no activation replication).
        return jnp.stack([t[:, :, h * dh:(h + 1) * dh] for h in range(H)],
                         axis=0).reshape(H * B, S, dh)

    qh, kh, vh = to_heads(q), to_heads(k), to_heads(v)    # (HB, S, dh) bf16

    # scores: (HB,S,dh) x (HB,S,dh) -> (HB,S,S), contract dh, batch HB
    s = jax.lax.dot_general(qh, kh, (((2,), (2,)), ((0,), (0,))),
                            preferred_element_type=jnp.float32)
    s = s + causal[None]
    s = s - jnp.max(s, axis=-1, keepdims=True)
    p = jnp.exp(s)
    p = p * pl.reciprocal(jnp.sum(p, axis=-1, keepdims=True), approx=True)

    # context: (HB,S,S) x (HB,S,dh) -> (HB,S,dh)
    ctx = jax.lax.dot_general(p.astype(jnp.bfloat16), vh,
                              (((2,), (1,)), ((0,), (0,))),
                              preferred_element_type=jnp.float32)
    ctx = ctx.astype(jnp.bfloat16).reshape(H, B, S, dh)

    # Head merge folded into a single K=D out-projection on the MXU.
    merged = jnp.concatenate([ctx[h] for h in range(H)], axis=-1)  # (B,S,D)
    attn = jnp.dot(merged.reshape(B * S, D), wo,
                   preferred_element_type=jnp.float32) + bo        # (B*S, D)
    x = x + attn.reshape(B, S, D)

    # ---- MLP (pre-LN, QuickGELU), bf16 matmuls with f32 accumulation ----
    xn2 = _layer_norm(x, ln2w, ln2b).reshape(B * S, D).astype(jnp.bfloat16)
    h1 = jnp.dot(xn2, w1, preferred_element_type=jnp.float32) + b1
    h1 = h1 * jax.nn.sigmoid(1.702 * h1)                  # QuickGELU (f32)
    h2 = jnp.dot(h1.astype(jnp.bfloat16), w2,
                 preferred_element_type=jnp.float32) + b2
    x = x + h2.reshape(B, S, D)

    # ---- write back the carried residual stream ----
    @pl.when(layer < nlayers - 1)
    def _():
        o_ref[...] = x

    @pl.when(layer == nlayers - 1)
    def _():
        if normalize:
            n2 = jnp.sum(x * x, axis=-1, keepdims=True)
            o_ref[...] = x * jax.lax.rsqrt(jnp.maximum(n2, 1e-12))
        else:
            o_ref[...] = x


# ----------------------------------------------------------------------------
# Wrapper
# ----------------------------------------------------------------------------
_WEIGHT_NAMES = ("ln1_w", "ln1_b", "w_qkv", "b_qkv", "w_o", "b_o",
                 "ln2_w", "ln2_b", "w_fc1", "b_fc1", "w_fc2", "b_fc2")


def _weight_spec(w):
    nd = w.ndim
    blk = (1,) + tuple(w.shape[1:])
    return pl.BlockSpec(blk, lambda l, _nd=nd: (l,) + (0,) * (_nd - 1))


def frozen_clip_text_embedder(tokens, params, *, max_length, nheads,
                              normalize=True):
    """tokens: (B, S) int32 token ids -> (B, max_length, D) float32."""
    # TODO(synk): clip.tokenize (BPE) has no Pallas equivalent; ids come in directly.
    # Glue: embedding gather + positional add stay in plain JAX/XLA (one fused op).
    x = jnp.take(params["token_embedding"], tokens, axis=0)      # (B, S, D) f32
    B, S, D = x.shape
    x = x + params["positional_embedding"][:S][None]

    # Causal additive bias, computed once (large finite negative; no inf-inf).
    row = jax.lax.broadcasted_iota(jnp.int32, (S, S), 0)
    col = jax.lax.broadcasted_iota(jnp.int32, (S, S), 1)
    causal = jnp.where(col <= row, 0.0, -1e30).astype(jnp.float32)

    stacked = params["stacked"]
    weights = [stacked[n] for n in _WEIGHT_NAMES]
    nlayers = weights[0].shape[0]

    kernel = functools.partial(_clip_stack_kernel, nheads=nheads,
                               normalize=normalize)
    out = pl.pallas_call(
        kernel,
        out_shape=jax.ShapeDtypeStruct((B, S, D), jnp.float32),
        grid=(nlayers,),
        in_specs=[pl.BlockSpec((B, S, D), lambda l: (0, 0, 0)),   # residual seed
                  pl.BlockSpec((S, S), lambda l: (0, 0))] +       # causal bias
                 [_weight_spec(w) for w in weights],
        out_specs=pl.BlockSpec((B, S, D), lambda l: (0, 0, 0)),
        compiler_params=pltpu.CompilerParams(
            # Layer axis carries the residual stream -> sequential.
            # TODO(synk): for compute-bound (large-B) configs on v7x, add a
            # leading "parallel" batch grid axis to use both TensorCores.
            dimension_semantics=("arbitrary",),
            # Enough for double-buffered per-layer weights in the lane-dense
            # layout; re-budget (or tile the FFN weights) for real CLIP on v7x.
            vmem_limit_bytes=48 * 1024 * 1024),
    )(x, causal, *weights)

    out = out[:, :max_length, :]   # per-row normalize commutes with row slice
    return out


# ----------------------------------------------------------------------------
# Deterministic parameter construction
# ----------------------------------------------------------------------------
def init_params(key, *, vocab, context_len, width, nheads, nlayers):
    D, L = width, nlayers
    F = 4 * D
    keys = jax.random.split(key, 6)
    wdt = jnp.bfloat16   # matmul weights bf16; LN params / biases stay f32
    params = {
        "token_embedding": (0.02 * jax.random.normal(
            keys[0], (vocab, D))).astype(jnp.float32),
        "positional_embedding": (0.01 * jax.random.normal(
            keys[1], (context_len, D))).astype(jnp.float32),
    }
    # Per-layer weights stacked along a leading L axis, lane-dense layouts:
    #   w_qkv[l] = concat([W_q, W_k, W_v], axis=1)   (D, 3D)
    #   w_o[l]   = W_o                               (D, D)  (rows = concat(heads))
    params["stacked"] = {
        "ln1_w": jnp.ones((L, 1, D), jnp.float32),
        "ln1_b": jnp.zeros((L, 1, D), jnp.float32),
        "w_qkv": (0.02 * jax.random.normal(keys[2], (L, D, 3 * D))).astype(wdt),
        "b_qkv": jnp.zeros((L, 1, 3 * D), jnp.float32),
        "w_o": (0.02 * jax.random.normal(keys[3], (L, D, D))).astype(wdt),
        "b_o": jnp.zeros((L, 1, D), jnp.float32),
        "ln2_w": jnp.ones((L, 1, D), jnp.float32),
        "ln2_b": jnp.zeros((L, 1, D), jnp.float32),
        "w_fc1": (0.02 * jax.random.normal(keys[4], (L, D, F))).astype(wdt),
        "b_fc1": jnp.zeros((L, 1, F), jnp.float32),
        "w_fc2": (0.02 * jax.random.normal(keys[5], (L, F, D))).astype(wdt),
        "b_fc2": jnp.zeros((L, 1, D), jnp.float32),
    }
    return params


# ----------------------------------------------------------------------------
# Main
# ----------------------------------------------------------------------------
if __name__ == "__main__":
    # Small but TPU-layout-friendly configuration (real CLIP: S=77->pad 128,
    # D=768, H=12, L=12, max_length=74).  D multiple of 128, S multiple of 8.
    B, S, D = 2, 16, 128
    VOCAB, NHEADS, NLAYERS, MAX_LENGTH = 64, 2, 2, 8

    key = jax.random.PRNGKey(0)
    k_tok, k_par = jax.random.split(key)
    tokens = jax.random.randint(k_tok, (B, S), 0, VOCAB, dtype=jnp.int32)
    params = init_params(k_par, vocab=VOCAB, context_len=S, width=D,
                         nheads=NHEADS, nlayers=NLAYERS)

    out = frozen_clip_text_embedder(tokens, params, max_length=MAX_LENGTH,
                                    nheads=NHEADS, normalize=True)
    out = jax.block_until_ready(out)

    assert out.shape == (B, MAX_LENGTH, D), out.shape
    # rows are unit-norm after the final normalize
    norms = jnp.linalg.norm(out, axis=-1)
    assert bool(jnp.all(jnp.abs(norms - 1.0) < 1e-3)), norms
    print("KERNEL_OK")
</pallas_src>

<mosaic_0001>
module attributes {stable_mosaic.version = 11 : i64} {
  func.func @_clip_stack_kernel(%arg0: i32, %arg1: memref<2x16x128xf32, #tpu.memory_space<vmem>>, %arg2: memref<16x16xf32, #tpu.memory_space<vmem>>, %arg3: memref<1x1x128xf32, #tpu.memory_space<vmem>>, %arg4: memref<1x1x128xf32, #tpu.memory_space<vmem>>, %arg5: memref<1x128x384xbf16, #tpu.memory_space<vmem>>, %arg6: memref<1x1x384xf32, #tpu.memory_space<vmem>>, %arg7: memref<1x128x128xbf16, #tpu.memory_space<vmem>>, %arg8: memref<1x1x128xf32, #tpu.memory_space<vmem>>, %arg9: memref<1x1x128xf32, #tpu.memory_space<vmem>>, %arg10: memref<1x1x128xf32, #tpu.memory_space<vmem>>, %arg11: memref<1x128x512xbf16, #tpu.memory_space<vmem>>, %arg12: memref<1x1x512xf32, #tpu.memory_space<vmem>>, %arg13: memref<1x512x128xbf16, #tpu.memory_space<vmem>>, %arg14: memref<1x1x128xf32, #tpu.memory_space<vmem>>, %arg15: memref<2x16x128xf32, #tpu.memory_space<vmem>>) attributes {dimension_semantics = [#tpu.dimension_semantics<arbitrary>], iteration_bounds = array<i64: 2>, scalar_prefetch = 0 : i64, scratch_operands = 0 : i64, tpu.core_type = #tpu.core_type<tc>, window_params = [{pipeline_mode = #tpu.pipeline_mode<synchronous>, transform_indices = @transform_0, window_bounds = array<i64: 2, 16, 128>}, {pipeline_mode = #tpu.pipeline_mode<synchronous>, transform_indices = @transform_1, window_bounds = array<i64: 16, 16>}, {transform_indices = @transform_2, window_bounds = array<i64: 1, 1, 128>}, {transform_indices = @transform_3, window_bounds = array<i64: 1, 1, 128>}, {transform_indices = @transform_4, window_bounds = array<i64: 1, 128, 384>}, {transform_indices = @transform_5, window_bounds = array<i64: 1, 1, 384>}, {transform_indices = @transform_6, window_bounds = array<i64: 1, 128, 128>}, {transform_indices = @transform_7, window_bounds = array<i64: 1, 1, 128>}, {transform_indices = @transform_8, window_bounds = array<i64: 1, 1, 128>}, {transform_indices = @transform_9, window_bounds = array<i64: 1, 1, 128>}, {transform_indices = @transform_10, window_bounds = array<i64: 1, 128, 512>}, {transform_indices = @transform_11, window_bounds = array<i64: 1, 1, 512>}, {transform_indices = @transform_12, window_bounds = array<i64: 1, 512, 128>}, {transform_indices = @transform_13, window_bounds = array<i64: 1, 1, 128>}, {pipeline_mode = #tpu.pipeline_mode<synchronous>, transform_indices = @transform_14, window_bounds = array<i64: 2, 16, 128>}]} {
    %c0_i32 = arith.constant 0 : i32
    %0 = arith.cmpi eq, %arg0, %c0_i32 : i32
    %1 = arith.extui %0 : i1 to i32
    %c0_i32_0 = arith.constant 0 : i32
    %2 = arith.cmpi ne, %1, %c0_i32_0 : i32
    scf.if %2 {
      %c0_64 = arith.constant 0 : index
      %c0_65 = arith.constant 0 : index
      %c0_66 = arith.constant 0 : index
      %161 = vector.load %arg1[%c0_64, %c0_65, %c0_66] : memref<2x16x128xf32, #tpu.memory_space<vmem>>, vector<2x16x128xf32>
      %c0_67 = arith.constant 0 : index
      %c0_68 = arith.constant 0 : index
      %c0_69 = arith.constant 0 : index
      %162 = vector.load %arg15[%c0_67, %c0_68, %c0_69] : memref<2x16x128xf32, #tpu.memory_space<vmem>>, vector<2x16x128xf32>
      tpu.vector_store %arg15[%c0_67, %c0_68, %c0_69], %161 {strides = array<i32>} : memref<2x16x128xf32, #tpu.memory_space<vmem>>, vector<2x16x128xf32>,
    } else {
    }
    %c0 = arith.constant 0 : index
    %c0_1 = arith.constant 0 : index
    %c0_2 = arith.constant 0 : index
    %3 = vector.load %arg15[%c0, %c0_1, %c0_2] : memref<2x16x128xf32, #tpu.memory_space<vmem>>, vector<2x16x128xf32>
    %c0_3 = arith.constant 0 : index
    %c0_4 = arith.constant 0 : index
    %c0_5 = arith.constant 0 : index
    %4 = vector.load %arg3[%c0_3, %c0_4, %c0_5] : memref<1x1x128xf32, #tpu.memory_space<vmem>>, vector<1x1x128xf32>
    %5 = vector.shape_cast %4 : vector<1x1x128xf32> to vector<1x128xf32>
    %c0_6 = arith.constant 0 : index
    %c0_7 = arith.constant 0 : index
    %c0_8 = arith.constant 0 : index
    %6 = vector.load %arg4[%c0_6, %c0_7, %c0_8] : memref<1x1x128xf32, #tpu.memory_space<vmem>>, vector<1x1x128xf32>
    %7 = vector.shape_cast %6 : vector<1x1x128xf32> to vector<1x128xf32>
    %c0_9 = arith.constant 0 : index
    %c0_10 = arith.constant 0 : index
    %c0_11 = arith.constant 0 : index
    %8 = vector.load %arg9[%c0_9, %c0_10, %c0_11] : memref<1x1x128xf32, #tpu.memory_space<vmem>>, vector<1x1x128xf32>
    %9 = vector.shape_cast %8 : vector<1x1x128xf32> to vector<1x128xf32>
    %c0_12 = arith.constant 0 : index
    %c0_13 = arith.constant 0 : index
    %c0_14 = arith.constant 0 : index
    %10 = vector.load %arg10[%c0_12, %c0_13, %c0_14] : memref<1x1x128xf32, #tpu.memory_space<vmem>>, vector<1x1x128xf32>
    %11 = vector.shape_cast %10 : vector<1x1x128xf32> to vector<1x128xf32>
    %c0_15 = arith.constant 0 : index
    %c0_16 = arith.constant 0 : index
    %c0_17 = arith.constant 0 : index
    %12 = vector.load %arg5[%c0_15, %c0_16, %c0_17] : memref<1x128x384xbf16, #tpu.memory_space<vmem>>, vector<1x128x384xbf16>
    %13 = vector.shape_cast %12 : vector<1x128x384xbf16> to vector<128x384xbf16>
    %c0_18 = arith.constant 0 : index
    %c0_19 = arith.constant 0 : index
    %c0_20 = arith.constant 0 : index
    %14 = vector.load %arg6[%c0_18, %c0_19, %c0_20] : memref<1x1x384xf32, #tpu.memory_space<vmem>>, vector<1x1x384xf32>
    %15 = vector.shape_cast %14 : vector<1x1x384xf32> to vector<1x384xf32>
    %c0_21 = arith.constant 0 : index
    %c0_22 = arith.constant 0 : index
    %c0_23 = arith.constant 0 : index
    %16 = vector.load %arg7[%c0_21, %c0_22, %c0_23] : memref<1x128x128xbf16, #tpu.memory_space<vmem>>, vector<1x128x128xbf16>
    %17 = vector.shape_cast %16 : vector<1x128x128xbf16> to vector<128x128xbf16>
    %c0_24 = arith.constant 0 : index
    %c0_25 = arith.constant 0 : index
    %c0_26 = arith.constant 0 : index
    %18 = vector.load %arg8[%c0_24, %c0_25, %c0_26] : memref<1x1x128xf32, #tpu.memory_space<vmem>>, vector<1x1x128xf32>
    %19 = vector.shape_cast %18 : vector<1x1x128xf32> to vector<1x128xf32>
    %c0_27 = arith.constant 0 : index
    %c0_28 = arith.constant 0 : index
    %c0_29 = arith.constant 0 : index
    %20 = vector.load %arg11[%c0_27, %c0_28, %c0_29] : memref<1x128x512xbf16, #tpu.memory_space<vmem>>, vector<1x128x512xbf16>
    %21 = vector.shape_cast %20 : vector<1x128x512xbf16> to vector<128x512xbf16>
    %c0_30 = arith.constant 0 : index
    %c0_31 = arith.constant 0 : index
    %c0_32 = arith.constant 0 : index
    %22 = vector.load %arg12[%c0_30, %c0_31, %c0_32] : memref<1x1x512xf32, #tpu.memory_space<vmem>>, vector<1x1x512xf32>
    %23 = vector.shape_cast %22 : vector<1x1x512xf32> to vector<1x512xf32>
    %c0_33 = arith.constant 0 : index
    %c0_34 = arith.constant 0 : index
    %c0_35 = arith.constant 0 : index
    %24 = vector.load %arg13[%c0_33, %c0_34, %c0_35] : memref<1x512x128xbf16, #tpu.memory_space<vmem>>, vector<1x512x128xbf16>
    %25 = vector.shape_cast %24 : vector<1x512x128xbf16> to vector<512x128xbf16>
    %c0_36 = arith.constant 0 : index
    %c0_37 = arith.constant 0 : index
    %c0_38 = arith.constant 0 : index
    %26 = vector.load %arg14[%c0_36, %c0_37, %c0_38] : memref<1x1x128xf32, #tpu.memory_space<vmem>>, vector<1x1x128xf32>
    %27 = vector.shape_cast %26 : vector<1x1x128xf32> to vector<1x128xf32>
    %c0_39 = arith.constant 0 : index
    %c0_40 = arith.constant 0 : index
    %28 = vector.load %arg2[%c0_39, %c0_40] : memref<16x16xf32, #tpu.memory_space<vmem>>, vector<16x16xf32>
    %cst = arith.constant dense<0.000000e+00> : vector<2x16xf32>
    %29 = vector.multi_reduction <add>, %3, %cst [2] : vector<2x16x128xf32> to vector<2x16xf32>
    %30 = vector.shape_cast %29 : vector<2x16xf32> to vector<2x16x1xf32>
    %cst_41 = arith.constant 1.280000e+02 : f32
    %31 = vector.broadcast %cst_41 : f32 to vector<2x16x1xf32>
    %32 = arith.divf %30, %31 : vector<2x16x1xf32>
    %33 = vector.broadcast %32 : vector<2x16x1xf32> to vector<2x16x128xf32>
    %34 = arith.subf %3, %33 : vector<2x16x128xf32>
    %35 = arith.mulf %34, %34 : vector<2x16x128xf32>
    %cst_42 = arith.constant dense<0.000000e+00> : vector<2x16xf32>
    %36 = vector.multi_reduction <add>, %35, %cst_42 [2] : vector<2x16x128xf32> to vector<2x16xf32>
    %37 = vector.shape_cast %36 : vector<2x16xf32> to vector<2x16x1xf32>
    %cst_43 = arith.constant 1.280000e+02 : f32
    %38 = vector.broadcast %cst_43 : f32 to vector<2x16x1xf32>
    %39 = arith.divf %37, %38 : vector<2x16x1xf32>
    %cst_44 = arith.constant 9.99999974E-6 : f32
    %40 = vector.broadcast %cst_44 : f32 to vector<2x16x1xf32>
    %41 = arith.addf %39, %40 : vector<2x16x1xf32>
    %42 = math.rsqrt %41 : vector<2x16x1xf32>
    %43 = vector.broadcast %42 : vector<2x16x1xf32> to vector<2x16x128xf32>
    %44 = arith.mulf %34, %43 : vector<2x16x128xf32>
    %45 = vector.shape_cast %5 : vector<1x128xf32> to vector<1x1x128xf32>
    %46 = vector.broadcast %45 : vector<1x1x128xf32> to vector<2x16x128xf32>
    %47 = arith.mulf %44, %46 : vector<2x16x128xf32>
    %48 = vector.shape_cast %7 : vector<1x128xf32> to vector<1x1x128xf32>
    %49 = vector.broadcast %48 : vector<1x1x128xf32> to vector<2x16x128xf32>
    %50 = arith.addf %47, %49 : vector<2x16x128xf32>
    %51 = vector.shape_cast %50 : vector<2x16x128xf32> to vector<32x128xf32>
    %52 = arith.truncf %51 : vector<32x128xf32> to vector<32x128xbf16>
    %cst_45 = arith.constant dense<0.000000e+00> : vector<32x384xf32>
    %53 = tpu.matmul %52, %13, %cst_45 {dimension_numbers = #tpu.dot_dimension_numbers<[1], [0], [0], [1], [0, 0, 1, 1], [], []>} : vector<32x128xbf16>, vector<128x384xbf16>, vector<32x384xf32> -> vector<32x384xf32>
    %54 = vector.broadcast %15 : vector<1x384xf32> to vector<32x384xf32>
    %55 = arith.addf %53, %54 : vector<32x384xf32>
    %56 = vector.extract_strided_slice %55 {offsets = [0, 0], sizes = [32, 128], strides = [1, 1]} : vector<32x384xf32> to vector<32x128xf32>
    %cst_46 = arith.constant 1.250000e-01 : f32
    %57 = vector.broadcast %cst_46 : f32 to vector<32x128xf32>
    %58 = arith.mulf %56, %57 : vector<32x128xf32>
    %59 = arith.truncf %58 : vector<32x128xf32> to vector<32x128xbf16>
    %60 = vector.shape_cast %59 : vector<32x128xbf16> to vector<2x16x128xbf16>
    %61 = vector.extract_strided_slice %55 {offsets = [0, 128], sizes = [32, 128], strides = [1, 1]} : vector<32x384xf32> to vector<32x128xf32>
    %62 = arith.truncf %61 : vector<32x128xf32> to vector<32x128xbf16>
    %63 = vector.shape_cast %62 : vector<32x128xbf16> to vector<2x16x128xbf16>
    %64 = vector.extract_strided_slice %55 {offsets = [0, 256], sizes = [32, 128], strides = [1, 1]} : vector<32x384xf32> to vector<32x128xf32>
    %65 = arith.truncf %64 : vector<32x128xf32> to vector<32x128xbf16>
    %66 = vector.shape_cast %65 : vector<32x128xbf16> to vector<2x16x128xbf16>
    %67 = vector.extract_strided_slice %60 {offsets = [0, 0, 0], sizes = [2, 16, 64], strides = [1, 1, 1]} : vector<2x16x128xbf16> to vector<2x16x64xbf16>
    %68 = vector.extract_strided_slice %60 {offsets = [0, 0, 64], sizes = [2, 16, 64], strides = [1, 1, 1]} : vector<2x16x128xbf16> to vector<2x16x64xbf16>
    %69 = vector.shape_cast %67 : vector<2x16x64xbf16> to vector<1x2x16x64xbf16>
    %70 = vector.shape_cast %68 : vector<2x16x64xbf16> to vector<1x2x16x64xbf16>
    %71 = tpu.concatenate %69, %70 in 0 : vector<1x2x16x64xbf16>, vector<1x2x16x64xbf16> -> vector<2x2x16x64xbf16>
    %72 = vector.shape_cast %71 : vector<2x2x16x64xbf16> to vector<4x16x64xbf16>
    %73 = vector.extract_strided_slice %63 {offsets = [0, 0, 0], sizes = [2, 16, 64], strides = [1, 1, 1]} : vector<2x16x128xbf16> to vector<2x16x64xbf16>
    %74 = vector.extract_strided_slice %63 {offsets = [0, 0, 64], sizes = [2, 16, 64], strides = [1, 1, 1]} : vector<2x16x128xbf16> to vector<2x16x64xbf16>
    %75 = vector.shape_cast %73 : vector<2x16x64xbf16> to vector<1x2x16x64xbf16>
    %76 = vector.shape_cast %74 : vector<2x16x64xbf16> to vector<1x2x16x64xbf16>
    %77 = tpu.concatenate %75, %76 in 0 : vector<1x2x16x64xbf16>, vector<1x2x16x64xbf16> -> vector<2x2x16x64xbf16>
    %78 = vector.shape_cast %77 : vector<2x2x16x64xbf16> to vector<4x16x64xbf16>
    %79 = vector.extract_strided_slice %66 {offsets = [0, 0, 0], sizes = [2, 16, 64], strides = [1, 1, 1]} : vector<2x16x128xbf16> to vector<2x16x64xbf16>
    %80 = vector.extract_strided_slice %66 {offsets = [0, 0, 64], sizes = [2, 16, 64], strides = [1, 1, 1]} : vector<2x16x128xbf16> to vector<2x16x64xbf16>
    %81 = vector.shape_cast %79 : vector<2x16x64xbf16> to vector<1x2x16x64xbf16>
    %82 = vector.shape_cast %80 : vector<2x16x64xbf16> to vector<1x2x16x64xbf16>
    %83 = tpu.concatenate %81, %82 in 0 : vector<1x2x16x64xbf16>, vector<1x2x16x64xbf16> -> vector<2x2x16x64xbf16>
    %84 = vector.shape_cast %83 : vector<2x2x16x64xbf16> to vector<4x16x64xbf16>
    %cst_47 = arith.constant dense<0.000000e+00> : vector<4x16x16xf32>
    %85 = tpu.matmul %72, %78, %cst_47 {dimension_numbers = #tpu.dot_dimension_numbers<[2], [2], [1], [1], [0, 0, 0, 1, 1, 1], [0], [0]>} : vector<4x16x64xbf16>, vector<4x16x64xbf16>, vector<4x16x16xf32> -> vector<4x16x16xf32>
    %86 = vector.shape_cast %28 : vector<16x16xf32> to vector<1x16x16xf32>
    %87 = vector.broadcast %86 : vector<1x16x16xf32> to vector<4x16x16xf32>
    %88 = arith.addf %85, %87 : vector<4x16x16xf32>
    %cst_48 = arith.constant dense<0xFF800000> : vector<4x16xf32>
    %89 = vector.multi_reduction <maximumf>, %88, %cst_48 [2] : vector<4x16x16xf32> to vector<4x16xf32>
    %90 = vector.shape_cast %89 : vector<4x16xf32> to vector<4x16x1xf32>
    %91 = vector.broadcast %90 : vector<4x16x1xf32> to vector<4x16x16xf32>
    %92 = arith.subf %88, %91 : vector<4x16x16xf32>
    %93 = math.exp %92 : vector<4x16x16xf32>
    %cst_49 = arith.constant dense<0.000000e+00> : vector<4x16xf32>
    %94 = vector.multi_reduction <add>, %93, %cst_49 [2] : vector<4x16x16xf32> to vector<4x16xf32>
    %95 = vector.shape_cast %94 : vector<4x16xf32> to vector<4x16x1xf32>
    %96 = tpu.reciprocal %95 {approx = true} : vector<4x16x1xf32> -> vector<4x16x1xf32>
    %97 = vector.broadcast %96 : vector<4x16x1xf32> to vector<4x16x16xf32>
    %98 = arith.mulf %93, %97 : vector<4x16x16xf32>
    %99 = arith.truncf %98 : vector<4x16x16xf32> to vector<4x16x16xbf16>
    %cst_50 = arith.constant dense<0.000000e+00> : vector<4x16x64xf32>
    %100 = tpu.matmul %99, %84, %cst_50 {dimension_numbers = #tpu.dot_dimension_numbers<[2], [1], [1], [2], [0, 0, 0, 1, 1, 2], [0], [0]>} : vector<4x16x16xbf16>, vector<4x16x64xbf16>, vector<4x16x64xf32> -> vector<4x16x64xf32>
    %101 = arith.truncf %100 : vector<4x16x64xf32> to vector<4x16x64xbf16>
    %102 = vector.shape_cast %101 : vector<4x16x64xbf16> to vector<2x2x16x64xbf16>
    %103 = vector.extract_strided_slice %102 {offsets = [0, 0, 0, 0], sizes = [1, 2, 16, 64], strides = [1, 1, 1, 1]} : vector<2x2x16x64xbf16> to vector<1x2x16x64xbf16>
    %104 = vector.shape_cast %103 : vector<1x2x16x64xbf16> to vector<2x16x64xbf16>
    %105 = vector.extract_strided_slice %102 {offsets = [1, 0, 0, 0], sizes = [1, 2, 16, 64], strides = [1, 1, 1, 1]} : vector<2x2x16x64xbf16> to vector<1x2x16x64xbf16>
    %106 = vector.shape_cast %105 : vector<1x2x16x64xbf16> to vector<2x16x64xbf16>
    %107 = tpu.concatenate %104, %106 in 2 : vector<2x16x64xbf16>, vector<2x16x64xbf16> -> vector<2x16x128xbf16>
    %108 = vector.shape_cast %107 : vector<2x16x128xbf16> to vector<32x128xbf16>
    %cst_51 = arith.constant dense<0.000000e+00> : vector<32x128xf32>
    %109 = tpu.matmul %108, %17, %cst_51 {dimension_numbers = #tpu.dot_dimension_numbers<[1], [0], [0], [1], [0, 0, 1, 1], [], []>} : vector<32x128xbf16>, vector<128x128xbf16>, vector<32x128xf32> -> vector<32x128xf32>
    %110 = vector.broadcast %19 : vector<1x128xf32> to vector<32x128xf32>
    %111 = arith.addf %109, %110 : vector<32x128xf32>
    %112 = vector.shape_cast %111 : vector<32x128xf32> to vector<2x16x128xf32>
    %113 = arith.addf %3, %112 : vector<2x16x128xf32>
    %cst_52 = arith.constant dense<0.000000e+00> : vector<2x16xf32>
    %114 = vector.multi_reduction <add>, %113, %cst_52 [2] : vector<2x16x128xf32> to vector<2x16xf32>
    %115 = vector.shape_cast %114 : vector<2x16xf32> to vector<2x16x1xf32>
    %cst_53 = arith.constant 1.280000e+02 : f32
    %116 = vector.broadcast %cst_53 : f32 to vector<2x16x1xf32>
    %117 = arith.divf %115, %116 : vector<2x16x1xf32>
    %118 = vector.broadcast %117 : vector<2x16x1xf32> to vector<2x16x128xf32>
    %119 = arith.subf %113, %118 : vector<2x16x128xf32>
    %120 = arith.mulf %119, %119 : vector<2x16x128xf32>
    %cst_54 = arith.constant dense<0.000000e+00> : vector<2x16xf32>
    %121 = vector.multi_reduction <add>, %120, %cst_54 [2] : vector<2x16x128xf32> to vector<2x16xf32>
    %122 = vector.shape_cast %121 : vector<2x16xf32> to vector<2x16x1xf32>
    %cst_55 = arith.constant 1.280000e+02 : f32
    %123 = vector.broadcast %cst_55 : f32 to vector<2x16x1xf32>
    %124 = arith.divf %122, %123 : vector<2x16x1xf32>
    %cst_56 = arith.constant 9.99999974E-6 : f32
    %125 = vector.broadcast %cst_56 : f32 to vector<2x16x1xf32>
    %126 = arith.addf %124, %125 : vector<2x16x1xf32>
    %127 = math.rsqrt %126 : vector<2x16x1xf32>
    %128 = vector.broadcast %127 : vector<2x16x1xf32> to vector<2x16x128xf32>
    %129 = arith.mulf %119, %128 : vector<2x16x128xf32>
    %130 = vector.shape_cast %9 : vector<1x128xf32> to vector<1x1x128xf32>
    %131 = vector.broadcast %130 : vector<1x1x128xf32> to vector<2x16x128xf32>
    %132 = arith.mulf %129, %131 : vector<2x16x128xf32>
    %133 = vector.shape_cast %11 : vector<1x128xf32> to vector<1x1x128xf32>
    %134 = vector.broadcast %133 : vector<1x1x128xf32> to vector<2x16x128xf32>
    %135 = arith.addf %132, %134 : vector<2x16x128xf32>
    %136 = vector.shape_cast %135 : vector<2x16x128xf32> to vector<32x128xf32>
    %137 = arith.truncf %136 : vector<32x128xf32> to vector<32x128xbf16>
    %cst_57 = arith.constant dense<0.000000e+00> : vector<32x512xf32>
    %138 = tpu.matmul %137, %21, %cst_57 {dimension_numbers = #tpu.dot_dimension_numbers<[1], [0], [0], [1], [0, 0, 1, 1], [], []>} : vector<32x128xbf16>, vector<128x512xbf16>, vector<32x512xf32> -> vector<32x512xf32>
    %139 = vector.broadcast %23 : vector<1x512xf32> to vector<32x512xf32>
    %140 = arith.addf %138, %139 : vector<32x512xf32>
    %cst_58 = arith.constant 1.702000e+00 : f32
    %141 = vector.broadcast %cst_58 : f32 to vector<32x512xf32>
    %142 = arith.mulf %141, %140 : vector<32x512xf32>
    %143 = arith.negf %142 : vector<32x512xf32>
    %144 = math.exp %143 : vector<32x512xf32>
    %cst_59 = arith.constant 1.000000e+00 : f32
    %145 = vector.broadcast %cst_59 : f32 to vector<32x512xf32>
    %146 = arith.addf %145, %144 : vector<32x512xf32>
    %147 = arith.divf %145, %146 : vector<32x512xf32>
    %148 = arith.mulf %140, %147 : vector<32x512xf32>
    %149 = arith.truncf %148 : vector<32x512xf32> to vector<32x512xbf16>
    %cst_60 = arith.constant dense<0.000000e+00> : vector<32x128xf32>
    %150 = tpu.matmul %149, %25, %cst_60 {dimension_numbers = #tpu.dot_dimension_numbers<[1], [0], [0], [1], [0, 0, 1, 1], [], []>} : vector<32x512xbf16>, vector<512x128xbf16>, vector<32x128xf32> -> vector<32x128xf32>
    %151 = vector.broadcast %27 : vector<1x128xf32> to vector<32x128xf32>
    %152 = arith.addf %150, %151 : vector<32x128xf32>
    %153 = vector.shape_cast %152 : vector<32x128xf32> to vector<2x16x128xf32>
    %154 = arith.addf %113, %153 : vector<2x16x128xf32>
    %c1_i32 = arith.constant 1 : i32
    %155 = arith.cmpi slt, %arg0, %c1_i32 : i32
    %156 = arith.extui %155 : i1 to i32
    %c0_i32_61 = arith.constant 0 : i32
    %157 = arith.cmpi ne, %156, %c0_i32_61 : i32
    scf.if %157 {
      %c0_64 = arith.constant 0 : index
      %c0_65 = arith.constant 0 : index
      %c0_66 = arith.constant 0 : index
      %161 = vector.load %arg15[%c0_64, %c0_65, %c0_66] : memref<2x16x128xf32, #tpu.memory_space<vmem>>, vector<2x16x128xf32>
      tpu.vector_store %arg15[%c0_64, %c0_65, %c0_66], %154 {strides = array<i32>} : memref<2x16x128xf32, #tpu.memory_space<vmem>>, vector<2x16x128xf32>,
    } else {
    }
    %c1_i32_62 = arith.constant 1 : i32
    %158 = arith.cmpi eq, %arg0, %c1_i32_62 : i32
    %159 = arith.extui %158 : i1 to i32
    %c0_i32_63 = arith.constant 0 : i32
    %160 = arith.cmpi ne, %159, %c0_i32_63 : i32
    scf.if %160 {
      %161 = arith.mulf %154, %154 : vector<2x16x128xf32>
      %cst_64 = arith.constant dense<0.000000e+00> : vector<2x16xf32>
      %162 = vector.multi_reduction <add>, %161, %cst_64 [2] : vector<2x16x128xf32> to vector<2x16xf32>
      %163 = vector.shape_cast %162 : vector<2x16xf32> to vector<2x16x1xf32>
      %cst_65 = arith.constant 9.99999996E-13 : f32
      %164 = vector.broadcast %cst_65 : f32 to vector<2x16x1xf32>
      %165 = arith.maximumf %163, %164 : vector<2x16x1xf32>
      %166 = math.rsqrt %165 : vector<2x16x1xf32>
      %167 = vector.broadcast %166 : vector<2x16x1xf32> to vector<2x16x128xf32>
      %168 = arith.mulf %154, %167 : vector<2x16x128xf32>
      %c0_66 = arith.constant 0 : index
      %c0_67 = arith.constant 0 : index
      %c0_68 = arith.constant 0 : index
      %169 = vector.load %arg15[%c0_66, %c0_67, %c0_68] : memref<2x16x128xf32, #tpu.memory_space<vmem>>, vector<2x16x128xf32>
      tpu.vector_store %arg15[%c0_66, %c0_67, %c0_68], %168 {strides = array<i32>} : memref<2x16x128xf32, #tpu.memory_space<vmem>>, vector<2x16x128xf32>,
    } else {
    }
    return
  }
  func.func @transform_0(%arg0: i32) -> (i32, i32, i32) {
    %c0_i32 = arith.constant 0 : i32
    %c0_i32_0 = arith.constant 0 : i32
    %c0_i32_1 = arith.constant 0 : i32
    %c0_i32_2 = arith.constant 0 : i32
    return %c0_i32, %c0_i32_0, %c0_i32_1 : i32, i32, i32
  }
  func.func @transform_1(%arg0: i32) -> (i32, i32) {
    %c0_i32 = arith.constant 0 : i32
    %c0_i32_0 = arith.constant 0 : i32
    %c0_i32_1 = arith.constant 0 : i32
    return %c0_i32, %c0_i32_0 : i32, i32
  }
  func.func @transform_2(%arg0: i32) -> (i32, i32, i32) {
    %c0_i32 = arith.constant 0 : i32
    %c0_i32_0 = arith.constant 0 : i32
    %c0_i32_1 = arith.constant 0 : i32
    return %arg0, %c0_i32, %c0_i32_0 : i32, i32, i32
  }
  func.func @transform_3(%arg0: i32) -> (i32, i32, i32) {
    %c0_i32 = arith.constant 0 : i32
    %c0_i32_0 = arith.constant 0 : i32
    %c0_i32_1 = arith.constant 0 : i32
    return %arg0, %c0_i32, %c0_i32_0 : i32, i32, i32
  }
  func.func @transform_4(%arg0: i32) -> (i32, i32, i32) {
    %c0_i32 = arith.constant 0 : i32
    %c0_i32_0 = arith.constant 0 : i32
    %c0_i32_1 = arith.constant 0 : i32
    return %arg0, %c0_i32, %c0_i32_0 : i32, i32, i32
  }
  func.func @transform_5(%arg0: i32) -> (i32, i32, i32) {
    %c0_i32 = arith.constant 0 : i32
    %c0_i32_0 = arith.constant 0 : i32
    %c0_i32_1 = arith.constant 0 : i32
    return %arg0, %c0_i32, %c0_i32_0 : i32, i32, i32
  }
  func.func @transform_6(%arg0: i32) -> (i32, i32, i32) {
    %c0_i32 = arith.constant 0 : i32
    %c0_i32_0 = arith.constant 0 : i32
    %c0_i32_1 = arith.constant 0 : i32
    return %arg0, %c0_i32, %c0_i32_0 : i32, i32, i32
  }
  func.func @transform_7(%arg0: i32) -> (i32, i32, i32) {
    %c0_i32 = arith.constant 0 : i32
    %c0_i32_0 = arith.constant 0 : i32
    %c0_i32_1 = arith.constant 0 : i32
    return %arg0, %c0_i32, %c0_i32_0 : i32, i32, i32
  }
  func.func @transform_8(%arg0: i32) -> (i32, i32, i32) {
    %c0_i32 = arith.constant 0 : i32
    %c0_i32_0 = arith.constant 0 : i32
    %c0_i32_1 = arith.constant 0 : i32
    return %arg0, %c0_i32, %c0_i32_0 : i32, i32, i32
  }
  func.func @transform_9(%arg0: i32) -> (i32, i32, i32) {
    %c0_i32 = arith.constant 0 : i32
    %c0_i32_0 = arith.constant 0 : i32
    %c0_i32_1 = arith.constant 0 : i32
    return %arg0, %c0_i32, %c0_i32_0 : i32, i32, i32
  }
  func.func @transform_10(%arg0: i32) -> (i32, i32, i32) {
    %c0_i32 = arith.constant 0 : i32
    %c0_i32_0 = arith.constant 0 : i32
    %c0_i32_1 = arith.constant 0 : i32
    return %arg0, %c0_i32, %c0_i32_0 : i32, i32, i32
  }
  func.func @transform_11(%arg0: i32) -> (i32, i32, i32) {
    %c0_i32 = arith.constant 0 : i32
    %c0_i32_0 = arith.constant 0 : i32
    %c0_i32_1 = arith.constant 0 : i32
    return %arg0, %c0_i32, %c0_i32_0 : i32, i32, i32
  }
  func.func @transform_12(%arg0: i32) -> (i32, i32, i32) {
    %c0_i32 = arith.constant 0 : i32
    %c0_i32_0 = arith.constant 0 : i32
    %c0_i32_1 = arith.constant 0 : i32
    return %arg0, %c0_i32, %c0_i32_0 : i32, i32, i32
  }
  func.func @transform_13(%arg0: i32) -> (i32, i32, i32) {
    %c0_i32 = arith.constant 0 : i32
    %c0_i32_0 = arith.constant 0 : i32
    %c0_i32_1 = arith.constant 0 : i32
    return %arg0, %c0_i32, %c0_i32_0 : i32, i32, i32
  }
  func.func @transform_14(%arg0: i32) -> (i32, i32, i32) {
    %c0_i32 = arith.constant 0 : i32
    %c0_i32_0 = arith.constant 0 : i32
    %c0_i32_1 = arith.constant 0 : i32
    %c0_i32_2 = arith.constant 0 : i32
    return %c0_i32, %c0_i32_0, %c0_i32_1 : i32, i32, i32
  }
}

</mosaic_0001>

<llo_original>
// kernel: tpu_custom_call.1
$region0: #{tpu_custom_call.1}
  #allocation0 [shape = 'u32[]', space=smem, size = 0x4, offset = 0x4, fixed_abs, tag = 'smem constant byte address 0x4 - core index']
  #allocation1 [shape = 'u32[144,128]{1,0:T(1,128)}', space=vmem, size = 0x12000, scoped, tag = 'internal scratch']
  %s0 = inlined_call_operand.hbm [shape: f32[2,16,128], index: 0, kind: input, shape index: {}]
  %s1 = inlined_call_operand.hbm [shape: f32[16,16], index: 1, kind: input, shape index: {}]
  %s2 = inlined_call_operand.vmem [shape: f32[2,1,128], index: 2, kind: input, shape index: {}]
  %s3 = inlined_call_operand.hbm [shape: f32[2,1,128], index: 3, kind: input, shape index: {}]
  %s4 = inlined_call_operand.hbm [shape: bf16[2,128,384], index: 4, kind: input, shape index: {}]
  %s5 = inlined_call_operand.vmem [shape: f32[2,1,384], index: 5, kind: input, shape index: {}]
  %s6 = inlined_call_operand.hbm [shape: bf16[2,128,128], index: 6, kind: input, shape index: {}]
  %s7 = inlined_call_operand.hbm [shape: f32[2,1,128], index: 7, kind: input, shape index: {}]
  %s8 = inlined_call_operand.hbm [shape: f32[2,1,128], index: 8, kind: input, shape index: {}]
  %s9 = inlined_call_operand.hbm [shape: f32[2,1,128], index: 9, kind: input, shape index: {}]
  %s10 = inlined_call_operand.hbm [shape: bf16[2,128,512], index: 10, kind: input, shape index: {}]
  %s11 = inlined_call_operand.vmem [shape: f32[2,1,512], index: 11, kind: input, shape index: {}]
  %s12 = inlined_call_operand.hbm [shape: bf16[2,512,128], index: 12, kind: input, shape index: {}]
  %s13 = inlined_call_operand.vmem [shape: f32[2,1,128], index: 13, kind: input, shape index: {}]
  %s14 = inlined_call_operand.hbm [shape: f32[2,16,128], index: 14, kind: output, shape index: {}]
  %s15 = sld [smem:[#allocation0]]
  $region141: #{tpu_custom_call.1} parent=0
    _
  %s17 = ssub.s32 1, %s15
  %s18 = scalar_select 0, %s17, %s15
  $region1: #{tpu_custom_call.1} parent=0
    #allocation2 [shape = 'u8[16384]{0}', space=vmem, size = 0x4000, scoped, tag = 'input window, operand 0, single buffered']
    #allocation3 [shape = 's32[2]{0}', space=sflag, size = 0x8, scoped, tag = 'scoped memory for tpu_custom_call.1']
    #allocation4 [shape = 's32[2]{0}', space=sflag, size = 0x8, scoped, tag = 'scoped memory for tpu_custom_call.1']
    #allocation5 [shape = 'u8[8192]{0}', space=vmem, size = 0x2000, scoped, tag = 'input window, operand 1, single buffered']
    #allocation6 [shape = 's32[1]{0}', space=sflag, size = 0x4, scoped, tag = 'scoped memory for tpu_custom_call.1']
    #allocation7 [shape = 'u8[1024]{0}', space=vmem, size = 0x400, scoped, tag = 'input window, operand 3']
    #allocation8 [shape = 'u8[196608]{0}', space=vmem, size = 0x30000, scoped, tag = 'input window, operand 4']
    #allocation9 [shape = 'u8[65536]{0}', space=vmem, size = 0x10000, scoped, tag = 'input window, operand 6']
    #allocation10 [shape = 'u8[1024]{0}', space=vmem, size = 0x400, scoped, tag = 'input window, operand 7']
    #allocation11 [shape = 'u8[1024]{0}', space=vmem, size = 0x400, scoped, tag = 'input window, operand 8']
    #allocation12 [shape = 'u8[1024]{0}', space=vmem, size = 0x400, scoped, tag = 'input window, operand 9']
    #allocation13 [shape = 'u8[262144]{0}', space=vmem, size = 0x40000, scoped, tag = 'input window, operand 10']
    #allocation14 [shape = 'u8[262144]{0}', space=vmem, size = 0x40000, scoped, tag = 'input window, operand 12']
    #allocation15 [shape = 'u8[16384]{0}', space=vmem, size = 0x4000, scoped, tag = 'output window, operand 0, single buffered']
    %19 = vsyncpa [#allocation3], 0
    %20 = vsyncpa [#allocation6], 0
    %21 = vsyncpa [#allocation4], 0
    loop: start=0, step=1, limit=4
    $region2: #{tpu_custom_call.1} parent=1 // loop_pre_header
      _
    $region3: #{tpu_custom_call.1} parent=1 // loop_header
      %s23 = sphi 0, %s27
      %p24 = scmp.ge.s32.totalorder %s23, 4
      %s31 = sphi 0, %s31
      %s33 = sphi 0, %s31
      %s34 = sphi 0, %s33
      %s48 = sphi 0, %s34
      %s52 = sphi 0, %s52
      %s54 = sphi 0, %s52
      %s55 = sphi 0, %s54
      %s69 = sphi 0, %s55
      %s75 = sphi 0, %s77
      %s78 = sphi 0, %s75
      %s79 = sphi 0, %s78
      %s95 = sphi 0, %s79
      %s101 = sphi 0, %s103
      %s104 = sphi 0, %s101
      %s105 = sphi 0, %s104
      %s121 = sphi 0, %s105
      %s127 = sphi 0, %s129
      %s130 = sphi 0, %s127
      %s131 = sphi 0, %s130
      %s147 = sphi 0, %s131
      %s153 = sphi 0, %s155
      %s156 = sphi 0, %s153
      %s157 = sphi 0, %s156
      %s173 = sphi 0, %s157
      %s179 = sphi 0, %s181
      %s182 = sphi 0, %s179
      %s183 = sphi 0, %s182
      %s199 = sphi 0, %s183
      %s205 = sphi 0, %s207
      %s208 = sphi 0, %s205
      %s209 = sphi 0, %s208
      %s225 = sphi 0, %s209
      %s231 = sphi 0, %s233
      %s234 = sphi 0, %s231
      %s235 = sphi 0, %s234
      %s251 = sphi 0, %s235
      %s257 = sphi 0, %s259
      %s260 = sphi 0, %s257
      %s261 = sphi 0, %s260
      %s277 = sphi 0, %s261
      %s283 = sphi 0, %s285
      %s286 = sphi 0, %s283
      %s287 = sphi 0, %s286
      %s303 = sphi 0, %s287
      %s309 = sphi 0, %s311
      %s312 = sphi 0, %s309
      %s313 = sphi 0, %s312
      %s329 = sphi 0, %s313
      %s335 = sphi 0, %s337
      %s338 = sphi 0, %s335
      %s339 = sphi 0, %s338
      %s355 = sphi 0, %s339
      %s361 = sphi 0, %s363
      %s364 = sphi 0, %s361
      %s365 = sphi 0, %s364
      %s381 = sphi 0, %s365
      %s385 = sphi 0, %s385
      %s387 = sphi 0, %s385
      %s388 = sphi 0, %s387
      %s402 = sphi 0, %s388
    $region4: #{tpu_custom_call.1} parent=1 // loop_header_branch
      %26 = sbr.rel (%p24) target = $region8
    $region5: #{tpu_custom_call.1} parent=1 // loop_body
      %s28 = ssub.s32 %s23, 1
      %s29 = ssub.s32 %s23, 2
      %s30 = sadd.s32 %s23, 1
      %s32 = sadd.s32 %s31, 1
      %p35 = scmp.eq.s32.totalorder %s23, 1
      %p36 = scmp.ne.s32.totalorder %s31, %s33
      %p37 = scmp.eq.s32.totalorder %s23, 0
      %p38 = por %p36, %p37
      %p39 = scmp.ne.s32.totalorder %s31, %s33
      %p40 = scmp.eq.s32.totalorder %s28, 1
      %p41 = por %p39, %p40
      %p42 = scmp.ne.s32.totalorder %s33, %s34
      %p43 = scmp.eq.s32.totalorder %s28, 0
      %p44 = por %p42, %p43
      %p45 = scmp.ne.s32.totalorder %s33, %s34
      %p46 = scmp.eq.s32.totalorder %s29, 1
      %p47 = por %p45, %p46
      %p49 = scmp.ne.s32.totalorder %s34, %s48
      %p50 = scmp.eq.s32.totalorder %s29, 0
      %p51 = por %p49, %p50
      %s53 = sadd.s32 %s52, 1
      %p56 = scmp.eq.s32.totalorder %s23, 1
      %p57 = scmp.ne.s32.totalorder %s52, %s54
      %p58 = scmp.eq.s32.totalorder %s23, 0
      %p59 = por %p57, %p58
      %p60 = scmp.ne.s32.totalorder %s52, %s54
      %p61 = scmp.eq.s32.totalorder %s28, 1
      %p62 = por %p60, %p61
      %p63 = scmp.ne.s32.totalorder %s54, %s55
      %p64 = scmp.eq.s32.totalorder %s28, 0
      %p65 = por %p63, %p64
      %p66 = scmp.ne.s32.totalorder %s54, %s55
      %p67 = scmp.eq.s32.totalorder %s29, 1
      %p68 = por %p66, %p67
      %p70 = scmp.ne.s32.totalorder %s55, %s69
      %p71 = scmp.eq.s32.totalorder %s29, 0
      %p72 = por %p70, %p71
      %s73 = ssub.s32 %s23, %s30
      %p74 = scmp.eq.s32.totalorder %s73, 0
      %s76 = sadd.s32 %s75, 1
      %s77 = scalar_select %p74, %s75, %s76
      %p80 = pneg %p74
      %p81 = scmp.eq.s32.totalorder %s23, 1
      %p82 = por %p80, %p81
      %p83 = scmp.ne.s32.totalorder %s75, %s78
      %p84 = scmp.eq.s32.totalorder %s23, 0
      %p85 = por %p83, %p84
      %p86 = scmp.ne.s32.totalorder %s75, %s78
      %p87 = scmp.eq.s32.totalorder %s28, 1
      %p88 = por %p86, %p87
      %p89 = scmp.ne.s32.totalorder %s78, %s79
      %p90 = scmp.eq.s32.totalorder %s28, 0
      %p91 = por %p89, %p90
      %p92 = scmp.ne.s32.totalorder %s78, %s79
      %p93 = scmp.eq.s32.totalorder %s29, 1
      %p94 = por %p92, %p93
      %p96 = scmp.ne.s32.totalorder %s79, %s95
      %p97 = scmp.eq.s32.totalorder %s29, 0
      %p98 = por %p96, %p97
      %s99 = ssub.s32 %s23, %s30
      %p100 = scmp.eq.s32.totalorder %s99, 0
      %s102 = sadd.s32 %s101, 1
      %s103 = scalar_select %p100, %s101, %s102
      %p106 = pneg %p100
      %p107 = scmp.eq.s32.totalorder %s23, 1
      %p108 = por %p106, %p107
      %p109 = scmp.ne.s32.totalorder %s101, %s104
      %p110 = scmp.eq.s32.totalorder %s23, 0
      %p111 = por %p109, %p110
      %p112 = scmp.ne.s32.totalorder %s101, %s104
      %p113 = scmp.eq.s32.totalorder %s28, 1
      %p114 = por %p112, %p113
      %p115 = scmp.ne.s32.totalorder %s104, %s105
      %p116 = scmp.eq.s32.totalorder %s28, 0
      %p117 = por %p115, %p116
      %p118 = scmp.ne.s32.totalorder %s104, %s105
      %p119 = scmp.eq.s32.totalorder %s29, 1
      %p120 = por %p118, %p119
      %p122 = scmp.ne.s32.totalorder %s105, %s121
      %p123 = scmp.eq.s32.totalorder %s29, 0
      %p124 = por %p122, %p123
      %s125 = ssub.s32 %s23, %s30
      %p126 = scmp.eq.s32.totalorder %s125, 0
      %s128 = sadd.s32 %s127, 1
      %s129 = scalar_select %p126, %s127, %s128
      %p132 = pneg %p126
      %p133 = scmp.eq.s32.totalorder %s23, 1
      %p134 = por %p132, %p133
      %p135 = scmp.ne.s32.totalorder %s127, %s130
      %p136 = scmp.eq.s32.totalorder %s23, 0
      %p137 = por %p135, %p136
      %p138 = scmp.ne.s32.totalorder %s127, %s130
      %p139 = scmp.eq.s32.totalorder %s28, 1
      %p140 = por %p138, %p139
      %p141 = scmp.ne.s32.totalorder %s130, %s131
      %p142 = scmp.eq.s32.totalorder %s28, 0
      %p143 = por %p141, %p142
      %p144 = scmp.ne.s32.totalorder %s130, %s131
      %p145 = scmp.eq.s32.totalorder %s29, 1
      %p146 = por %p144, %p145
      %p148 = scmp.ne.s32.totalorder %s131, %s147
      %p149 = scmp.eq.s32.totalorder %s29, 0
      %p150 = por %p148, %p149
      %s151 = ssub.s32 %s23, %s30
      %p152 = scmp.eq.s32.totalorder %s151, 0
      %s154 = sadd.s32 %s153, 1
      %s155 = scalar_select %p152, %s153, %s154
      %p158 = pneg %p152
      %p159 = scmp.eq.s32.totalorder %s23, 1
      %p160 = por %p158, %p159
      %p161 = scmp.ne.s32.totalorder %s153, %s156
      %p162 = scmp.eq.s32.totalorder %s23, 0
      %p163 = por %p161, %p162
      %p164 = scmp.ne.s32.totalorder %s153, %s156
      %p165 = scmp.eq.s32.totalorder %s28, 1
      %p166 = por %p164, %p165
      %p167 = scmp.ne.s32.totalorder %s156, %s157
      %p168 = scmp.eq.s32.totalorder %s28, 0
      %p169 = por %p167, %p168
      %p170 = scmp.ne.s32.totalorder %s156, %s157
      %p171 = scmp.eq.s32.totalorder %s29, 1
      %p172 = por %p170, %p171
      %p174 = scmp.ne.s32.totalorder %s157, %s173
      %p175 = scmp.eq.s32.totalorder %s29, 0
      %p176 = por %p174, %p175
      %s177 = ssub.s32 %s23, %s30
      %p178 = scmp.eq.s32.totalorder %s177, 0
      %s180 = sadd.s32 %s179, 1
      %s181 = scalar_select %p178, %s179, %s180
      %p184 = pneg %p178
      %p185 = scmp.eq.s32.totalorder %s23, 1
      %p186 = por %p184, %p185
      %p187 = scmp.ne.s32.totalorder %s179, %s182
      %p188 = scmp.eq.s32.totalorder %s23, 0
      %p189 = por %p187, %p188
      %p190 = scmp.ne.s32.totalorder %s179, %s182
      %p191 = scmp.eq.s32.totalorder %s28, 1
      %p192 = por %p190, %p191
      %p193 = scmp.ne.s32.totalorder %s182, %s183
      %p194 = scmp.eq.s32.totalorder %s28, 0
      %p195 = por %p193, %p194
      %p196 = scmp.ne.s32.totalorder %s182, %s183
      %p197 = scmp.eq.s32.totalorder %s29, 1
      %p198 = por %p196, %p197
      %p200 = scmp.ne.s32.totalorder %s183, %s199
      %p201 = scmp.eq.s32.totalorder %s29, 0
      %p202 = por %p200, %p201
      %s203 = ssub.s32 %s23, %s30
      %p204 = scmp.eq.s32.totalorder %s203, 0
      %s206 = sadd.s32 %s205, 1
      %s207 = scalar_select %p204, %s205, %s206
      %p210 = pneg %p204
      %p211 = scmp.eq.s32.totalorder %s23, 1
      %p212 = por %p210, %p211
      %p213 = scmp.ne.s32.totalorder %s205, %s208
      %p214 = scmp.eq.s32.totalorder %s23, 0
      %p215 = por %p213, %p214
      %p216 = scmp.ne.s32.totalorder %s205, %s208
      %p217 = scmp.eq.s32.totalorder %s28, 1
      %p218 = por %p216, %p217
      %p219 = scmp.ne.s32.totalorder %s208, %s209
      %p220 = scmp.eq.s32.totalorder %s28, 0
      %p221 = por %p219, %p220
      %p222 = scmp.ne.s32.totalorder %s208, %s209
      %p223 = scmp.eq.s32.totalorder %s29, 1
      %p224 = por %p222, %p223
      %p226 = scmp.ne.s32.totalorder %s209, %s225
      %p227 = scmp.eq.s32.totalorder %s29, 0
      %p228 = por %p226, %p227
      %s229 = ssub.s32 %s23, %s30
      %p230 = scmp.eq.s32.totalorder %s229, 0
      %s232 = sadd.s32 %s231, 1
      %s233 = scalar_select %p230, %s231, %s232
      %p236 = pneg %p230
      %p237 = scmp.eq.s32.totalorder %s23, 1
      %p238 = por %p236, %p237
      %p239 = scmp.ne.s32.totalorder %s231, %s234
      %p240 = scmp.eq.s32.totalorder %s23, 0
      %p241 = por %p239, %p240
      %p242 = scmp.ne.s32.totalorder %s231, %s234
      %p243 = scmp.eq.s32.totalorder %s28, 1
      %p244 = por %p242, %p243
      %p245 = scmp.ne.s32.totalorder %s234, %s235
      %p246 = scmp.eq.s32.totalorder %s28, 0
      %p247 = por %p245, %p246
      %p248 = scmp.ne.s32.totalorder %s234, %s235
      %p249 = scmp.eq.s32.totalorder %s29, 1
      %p250 = por %p248, %p249
      %p252 = scmp.ne.s32.totalorder %s235, %s251
      %p253 = scmp.eq.s32.totalorder %s29, 0
      %p254 = por %p252, %p253
      %s255 = ssub.s32 %s23, %s30
      %p256 = scmp.eq.s32.totalorder %s255, 0
      %s258 = sadd.s32 %s257, 1
      %s259 = scalar_select %p256, %s257, %s258
      %p262 = pneg %p256
      %p263 = scmp.eq.s32.totalorder %s23, 1
      %p264 = por %p262, %p263
      %p265 = scmp.ne.s32.totalorder %s257, %s260
      %p266 = scmp.eq.s32.totalorder %s23, 0
      %p267 = por %p265, %p266
      %p268 = scmp.ne.s32.totalorder %s257, %s260
      %p269 = scmp.eq.s32.totalorder %s28, 1
      %p270 = por %p268, %p269
      %p271 = scmp.ne.s32.totalorder %s260, %s261
      %p272 = scmp.eq.s32.totalorder %s28, 0
      %p273 = por %p271, %p272
      %p274 = scmp.ne.s32.totalorder %s260, %s261
      %p275 = scmp.eq.s32.totalorder %s29, 1
      %p276 = por %p274, %p275
      %p278 = scmp.ne.s32.totalorder %s261, %s277
      %p279 = scmp.eq.s32.totalorder %s29, 0
      %p280 = por %p278, %p279
      %s281 = ssub.s32 %s23, %s30
      %p282 = scmp.eq.s32.totalorder %s281, 0
      %s284 = sadd.s32 %s283, 1
      %s285 = scalar_select %p282, %s283, %s284
      %p288 = pneg %p282
      %p289 = scmp.eq.s32.totalorder %s23, 1
      %p290 = por %p288, %p289
      %p291 = scmp.ne.s32.totalorder %s283, %s286
      %p292 = scmp.eq.s32.totalorder %s23, 0
      %p293 = por %p291, %p292
      %p294 = scmp.ne.s32.totalorder %s283, %s286
      %p295 = scmp.eq.s32.totalorder %s28, 1
      %p296 = por %p294, %p295
      %p297 = scmp.ne.s32.totalorder %s286, %s287
      %p298 = scmp.eq.s32.totalorder %s28, 0
      %p299 = por %p297, %p298
      %p300 = scmp.ne.s32.totalorder %s286, %s287
      %p301 = scmp.eq.s32.totalorder %s29, 1
      %p302 = por %p300, %p301
      %p304 = scmp.ne.s32.totalorder %s287, %s303
      %p305 = scmp.eq.s32.totalorder %s29, 0
      %p306 = por %p304, %p305
      %s307 = ssub.s32 %s23, %s30
      %p308 = scmp.eq.s32.totalorder %s307, 0
      %s310 = sadd.s32 %s309, 1
      %s311 = scalar_select %p308, %s309, %s310
      %p314 = pneg %p308
      %p315 = scmp.eq.s32.totalorder %s23, 1
      %p316 = por %p314, %p315
      %p317 = scmp.ne.s32.totalorder %s309, %s312
      %p318 = scmp.eq.s32.totalorder %s23, 0
      %p319 = por %p317, %p318
      %p320 = scmp.ne.s32.totalorder %s309, %s312
      %p321 = scmp.eq.s32.totalorder %s28, 1
      %p322 = por %p320, %p321
      %p323 = scmp.ne.s32.totalorder %s312, %s313
      %p324 = scmp.eq.s32.totalorder %s28, 0
      %p325 = por %p323, %p324
      %p326 = scmp.ne.s32.totalorder %s312, %s313
      %p327 = scmp.eq.s32.totalorder %s29, 1
      %p328 = por %p326, %p327
      %p330 = scmp.ne.s32.totalorder %s313, %s329
      %p331 = scmp.eq.s32.totalorder %s29, 0
      %p332 = por %p330, %p331
      %s333 = ssub.s32 %s23, %s30
      %p334 = scmp.eq.s32.totalorder %s333, 0
      %s336 = sadd.s32 %s335, 1
      %s337 = scalar_select %p334, %s335, %s336
      %p340 = pneg %p334
      %p341 = scmp.eq.s32.totalorder %s23, 1
      %p342 = por %p340, %p341
      %p343 = scmp.ne.s32.totalorder %s335, %s338
      %p344 = scmp.eq.s32.totalorder %s23, 0
      %p345 = por %p343, %p344
      %p346 = scmp.ne.s32.totalorder %s335, %s338
      %p347 = scmp.eq.s32.totalorder %s28, 1
      %p348 = por %p346, %p347
      %p349 = scmp.ne.s32.totalorder %s338, %s339
      %p350 = scmp.eq.s32.totalorder %s28, 0
      %p351 = por %p349, %p350
      %p352 = scmp.ne.s32.totalorder %s338, %s339
      %p353 = scmp.eq.s32.totalorder %s29, 1
      %p354 = por %p352, %p353
      %p356 = scmp.ne.s32.totalorder %s339, %s355
      %p357 = scmp.eq.s32.totalorder %s29, 0
      %p358 = por %p356, %p357
      %s359 = ssub.s32 %s23, %s30
      %p360 = scmp.eq.s32.totalorder %s359, 0
      %s362 = sadd.s32 %s361, 1
      %s363 = scalar_select %p360, %s361, %s362
      %p366 = pneg %p360
      %p367 = scmp.eq.s32.totalorder %s23, 1
      %p368 = por %p366, %p367
      %p369 = scmp.ne.s32.totalorder %s361, %s364
      %p370 = scmp.eq.s32.totalorder %s23, 0
      %p371 = por %p369, %p370
      %p372 = scmp.ne.s32.totalorder %s361, %s364
      %p373 = scmp.eq.s32.totalorder %s28, 1
      %p374 = por %p372, %p373
      %p375 = scmp.ne.s32.totalorder %s364, %s365
      %p376 = scmp.eq.s32.totalorder %s28, 0
      %p377 = por %p375, %p376
      %p378 = scmp.ne.s32.totalorder %s364, %s365
      %p379 = scmp.eq.s32.totalorder %s29, 1
      %p380 = por %p378, %p379
      %p382 = scmp.ne.s32.totalorder %s365, %s381
      %p383 = scmp.eq.s32.totalorder %s29, 0
      %p384 = por %p382, %p383
      %s386 = sadd.s32 %s385, 1
      %p389 = scmp.eq.s32.totalorder %s23, 1
      %p390 = scmp.ne.s32.totalorder %s385, %s387
      %p391 = scmp.eq.s32.totalorder %s23, 0
      %p392 = por %p390, %p391
      %p393 = scmp.ne.s32.totalorder %s385, %s387
      %p394 = scmp.eq.s32.totalorder %s28, 1
      %p395 = por %p393, %p394
      %p396 = scmp.ne.s32.totalorder %s387, %s388
      %p397 = scmp.eq.s32.totalorder %s28, 0
      %p398 = por %p396, %p397
      %p399 = scmp.ne.s32.totalorder %s387, %s388
      %p400 = scmp.eq.s32.totalorder %s29, 1
      %p401 = por %p399, %p400
      %p403 = scmp.ne.s32.totalorder %s388, %s402
      %p404 = scmp.eq.s32.totalorder %s29, 0
      %p405 = por %p403, %p404
      %p406 = scmp.le.s32.totalorder 1, %s23
      %p407 = scmp.lt.s32.totalorder %s23, 3
      %p408 = pnand %p406, %p407
      %p409 = pneg %p408
      // Predicated region
      $region9: #{tpu_custom_call.1} parent=5 // pred_check
        _
      $region10: #{tpu_custom_call.1} parent=5 // pred_check_branch
        %411 = sbr.rel (%p408) target = $region12
      $region11: #{tpu_custom_call.1} parent=5 // pred_region
        %s412 = ssub.s32 %s23, 1
        // Predicated region
        $region13: #{tpu_custom_call.1} parent=11 // pred_check
          %p413 = pneg %p44
        $region14: #{tpu_custom_call.1} parent=11 // pred_check_branch
          %415 = sbr.rel (%p413) target = $region16
        $region15: #{tpu_custom_call.1} parent=11 // pred_region
          %s417 = ssub.s32 512, 512
          %418 = vsyncadd [#allocation3], %s417
          %s419 = sshll.u32 [#allocation2], 4
          %s420 = int_to_ptr.vmem [resolvable:$true] %s419
          %425 = dma.hbm_to_vmem [thread:$0]  %s0, 512, %s420, [#allocation3], 128, 128, 8
        $region16: #{tpu_custom_call.1} parent=11 // pred_fallthru
          _
        // Predicated region
        $region17: #{tpu_custom_call.1} parent=11 // pred_check
          %p426 = pneg %p65
        $region18: #{tpu_custom_call.1} parent=11 // pred_check_branch
          %428 = sbr.rel (%p426) target = $region20
        $region19: #{tpu_custom_call.1} parent=11 // pred_region
          %s430 = ssub.s32 256, 256
          %431 = vsyncadd [#allocation6], %s430
          %s432 = sshll.u32 [#allocation5], 4
          %s433 = int_to_ptr.vmem [resolvable:$true] %s432
          %438 = dma.hbm_to_vmem [thread:$0]  %s1, 256, %s433, [#allocation6], 128, 128, 8
        $region20: #{tpu_custom_call.1} parent=11 // pred_fallthru
          _
      $region12: #{tpu_custom_call.1} parent=5 // pred_fallthru
        _
      %p439 = scmp.lt.s32.totalorder %s23, 2
      // Predicated region
      $region21: #{tpu_custom_call.1} parent=5 // pred_check
        %p440 = pneg %p439
      $region22: #{tpu_custom_call.1} parent=5 // pred_check_branch
        %442 = sbr.rel (%p440) target = $region24
      $region23: #{tpu_custom_call.1} parent=5 // pred_region
        // Predicated region
        $region25: #{tpu_custom_call.1} parent=23 // pred_check
          %p443 = pneg %p85
        $region26: #{tpu_custom_call.1} parent=23 // pred_check_branch
          %445 = sbr.rel (%p443) target = $region28
        $region27: #{tpu_custom_call.1} parent=23 // pred_region
          %p446 = scmp.lt.s32.totalorder %s23, 1
          %s447 = scalar_select %p446, %s23, 1
          %s448 = scalar_lea.vmem %s2, %s447
        $region28: #{tpu_custom_call.1} parent=23 // pred_fallthru
          _
        // Predicated region
        $region29: #{tpu_custom_call.1} parent=23 // pred_check
          %p449 = pneg %p111
        $region30: #{tpu_custom_call.1} parent=23 // pred_check_branch
          %451 = sbr.rel (%p449) target = $region32
        $region31: #{tpu_custom_call.1} parent=23 // pred_region
          %s452 = sand.u32 %s23, 1
          %s453 = scalar_lea.sflag [#allocation3], %s452
          %s454 = sand.u32 %s101, 1
          %s455 = scalar_lea.vmem [#allocation7], %s454
          %s457 = ssub.s32 16, 16
          %458 = vsyncadd %s453, %s457
          %s459 = smul.addr %s23, 16
          %s460 = scalar_lea.hbm %s3, %s459
          %s462 = sshll.u32 %s455, 4
          %s463 = int_to_ptr.vmem [resolvable:$true] %s462
          %465 = dma.hbm_to_vmem [thread:$0]  %s460, 16, %s463, %s453
        $region32: #{tpu_custom_call.1} parent=23 // pred_fallthru
          _
        // Predicated region
        $region33: #{tpu_custom_call.1} parent=23 // pred_check
          %p466 = pneg %p137
        $region34: #{tpu_custom_call.1} parent=23 // pred_check_branch
          %468 = sbr.rel (%p466) target = $region36
        $region35: #{tpu_custom_call.1} parent=23 // pred_region
          %s469 = sand.u32 %s23, 1
          %s470 = scalar_lea.sflag [#allocation3], %s469
          %s471 = sand.u32 %s127, 1
          %s472 = smul.addr %s471, 192
          %s473 = scalar_lea.vmem [#allocation8], %s472
          %s475 = ssub.s32 3072, 3072
          %476 = vsyncadd %s470, %s475
          %s477 = smul.addr %s23, 48
          %s478 = smul.addr %s477, 64
          %s479 = scalar_lea.hbm %s4, %s478
          %s480 = sshll.u32 %s473, 4
          %s481 = int_to_ptr.vmem [resolvable:$true] %s480
          %486 = dma.hbm_to_vmem [thread:$0]  %s479, 3072, %s481, %s470, 192, 192, 12
        $region36: #{tpu_custom_call.1} parent=23 // pred_fallthru
          _
        // Predicated region
        $region37: #{tpu_custom_call.1} parent=23 // pred_check
          %p487 = pneg %p163
        $region38: #{tpu_custom_call.1} parent=23 // pred_check_branch
          %489 = sbr.rel (%p487) target = $region40
        $region39: #{tpu_custom_call.1} parent=23 // pred_region
          %p490 = scmp.lt.s32.totalorder %s23, 1
          %s491 = scalar_select %p490, %s23, 1
          %s492 = smul.addr %s491, 3
          %s493 = scalar_lea.vmem %s5, %s492
        $region40: #{tpu_custom_call.1} parent=23 // pred_fallthru
          _
        // Predicated region
        $region41: #{tpu_custom_call.1} parent=23 // pred_check
          %p494 = pneg %p189
        $region42: #{tpu_custom_call.1} parent=23 // pred_check_branch
          %496 = sbr.rel (%p494) target = $region44
        $region43: #{tpu_custom_call.1} parent=23 // pred_region
          %s497 = sand.u32 %s23, 1
          %s498 = scalar_lea.sflag [#allocation3], %s497
          %s499 = sand.u32 %s179, 1
          %s500 = smul.addr %s499, 64
          %s501 = scalar_lea.vmem [#allocation9], %s500
          %s503 = ssub.s32 1024, 1024
          %504 = vsyncadd %s498, %s503
          %s505 = smul.addr %s23, 16
          %s506 = smul.addr %s505, 64
          %s507 = scalar_lea.hbm %s6, %s506
          %s508 = sshll.u32 %s501, 4
          %s509 = int_to_ptr.vmem [resolvable:$true] %s508
          %514 = dma.hbm_to_vmem [thread:$0]  %s507, 1024, %s509, %s498, 64, 64, 4
        $region44: #{tpu_custom_call.1} parent=23 // pred_fallthru
          _
        // Predicated region
        $region45: #{tpu_custom_call.1} parent=23 // pred_check
          %p515 = pneg %p215
        $region46: #{tpu_custom_call.1} parent=23 // pred_check_branch
          %517 = sbr.rel (%p515) target = $region48
        $region47: #{tpu_custom_call.1} parent=23 // pred_region
          %s518 = sand.u32 %s23, 1
          %s519 = scalar_lea.sflag [#allocation3], %s518
          %s520 = sand.u32 %s205, 1
          %s521 = scalar_lea.vmem [#allocation10], %s520
          %s523 = ssub.s32 16, 16
          %524 = vsyncadd %s519, %s523
          %s525 = smul.addr %s23, 16
          %s526 = scalar_lea.hbm %s7, %s525
          %s528 = sshll.u32 %s521, 4
          %s529 = int_to_ptr.vmem [resolvable:$true] %s528
          %531 = dma.hbm_to_vmem [thread:$0]  %s526, 16, %s529, %s519
        $region48: #{tpu_custom_call.1} parent=23 // pred_fallthru
          _
        // Predicated region
        $region49: #{tpu_custom_call.1} parent=23 // pred_check
          %p532 = pneg %p241
        $region50: #{tpu_custom_call.1} parent=23 // pred_check_branch
          %534 = sbr.rel (%p532) target = $region52
        $region51: #{tpu_custom_call.1} parent=23 // pred_region
          %s535 = sand.u32 %s23, 1
          %s536 = scalar_lea.sflag [#allocation3], %s535
          %s537 = sand.u32 %s231, 1
          %s538 = scalar_lea.vmem [#allocation11], %s537
          %s540 = ssub.s32 16, 16
          %541 = vsyncadd %s536, %s540
          %s542 = smul.addr %s23, 16
          %s543 = scalar_lea.hbm %s8, %s542
          %s545 = sshll.u32 %s538, 4
          %s546 = int_to_ptr.vmem [resolvable:$true] %s545
          %548 = dma.hbm_to_vmem [thread:$0]  %s543, 16, %s546, %s536
        $region52: #{tpu_custom_call.1} parent=23 // pred_fallthru
          _
        // Predicated region
        $region53: #{tpu_custom_call.1} parent=23 // pred_check
          %p549 = pneg %p267
        $region54: #{tpu_custom_call.1} parent=23 // pred_check_branch
          %551 = sbr.rel (%p549) target = $region56
        $region55: #{tpu_custom_call.1} parent=23 // pred_region
          %s552 = sand.u32 %s23, 1
          %s553 = scalar_lea.sflag [#allocation3], %s552
          %s554 = sand.u32 %s257, 1
          %s555 = scalar_lea.vmem [#allocation12], %s554
          %s557 = ssub.s32 16, 16
          %558 = vsyncadd %s553, %s557
          %s559 = smul.addr %s23, 16
          %s560 = scalar_lea.hbm %s9, %s559
          %s562 = sshll.u32 %s555, 4
          %s563 = int_to_ptr.vmem [resolvable:$true] %s562
          %565 = dma.hbm_to_vmem [thread:$0]  %s560, 16, %s563, %s553
        $region56: #{tpu_custom_call.1} parent=23 // pred_fallthru
          _
        // Predicated region
        $region57: #{tpu_custom_call.1} parent=23 // pred_check
          %p566 = pneg %p293
        $region58: #{tpu_custom_call.1} parent=23 // pred_check_branch
          %568 = sbr.rel (%p566) target = $region60
        $region59: #{tpu_custom_call.1} parent=23 // pred_region
          %s569 = sand.u32 %s23, 1
          %s570 = scalar_lea.sflag [#allocation3], %s569
          %s571 = sand.u32 %s283, 1
          %s572 = smul.addr %s571, 256
          %s573 = scalar_lea.vmem [#allocation13], %s572
          %s575 = ssub.s32 4096, 4096
          %576 = vsyncadd %s570, %s575
          %s577 = smul.addr %s23, 64
          %s578 = smul.addr %s577, 64
          %s579 = scalar_lea.hbm %s10, %s578
          %s580 = sshll.u32 %s573, 4
          %s581 = int_to_ptr.vmem [resolvable:$true] %s580
          %586 = dma.hbm_to_vmem [thread:$0]  %s579, 4096, %s581, %s570, 256, 256, 16
        $region60: #{tpu_custom_call.1} parent=23 // pred_fallthru
          _
        // Predicated region
        $region61: #{tpu_custom_call.1} parent=23 // pred_check
          %p587 = pneg %p319
        $region62: #{tpu_custom_call.1} parent=23 // pred_check_branch
          %589 = sbr.rel (%p587) target = $region64
        $region63: #{tpu_custom_call.1} parent=23 // pred_region
          %p590 = scmp.lt.s32.totalorder %s23, 1
          %s591 = scalar_select %p590, %s23, 1
          %s592 = smul.addr %s591, 4
          %s593 = scalar_lea.vmem %s11, %s592
        $region64: #{tpu_custom_call.1} parent=23 // pred_fallthru
          _
        // Predicated region
        $region65: #{tpu_custom_call.1} parent=23 // pred_check
          %p594 = pneg %p345
        $region66: #{tpu_custom_call.1} parent=23 // pred_check_branch
          %596 = sbr.rel (%p594) target = $region68
        $region67: #{tpu_custom_call.1} parent=23 // pred_region
          %s597 = sand.u32 %s23, 1
          %s598 = scalar_lea.sflag [#allocation3], %s597
          %s599 = sand.u32 %s335, 1
          %s600 = smul.addr %s599, 256
          %s601 = scalar_lea.vmem [#allocation14], %s600
          %s603 = ssub.s32 4096, 4096
          %604 = vsyncadd %s598, %s603
          %s605 = smul.addr %s23, 64
          %s606 = smul.addr %s605, 64
          %s607 = scalar_lea.hbm %s12, %s606
          %s608 = sshll.u32 %s601, 4
          %s609 = int_to_ptr.vmem [resolvable:$true] %s608
          %614 = dma.hbm_to_vmem [thread:$0]  %s607, 4096, %s609, %s598, 64, 64, 4
        $region68: #{tpu_custom_call.1} parent=23 // pred_fallthru
          _
        // Predicated region
        $region69: #{tpu_custom_call.1} parent=23 // pred_check
          %p615 = pneg %p371
        $region70: #{tpu_custom_call.1} parent=23 // pred_check_branch
          %617 = sbr.rel (%p615) target = $region72
        $region71: #{tpu_custom_call.1} parent=23 // pred_region
          %p618 = scmp.lt.s32.totalorder %s23, 1
          %s619 = scalar_select %p618, %s23, 1
          %s620 = scalar_lea.vmem %s13, %s619
        $region72: #{tpu_custom_call.1} parent=23 // pred_fallthru
          _
      $region24: #{tpu_custom_call.1} parent=5 // pred_fallthru
        _
      %p621 = scmp.le.s32.totalorder 1, %s23
      %p622 = scmp.lt.s32.totalorder %s23, 3
      %p623 = pnand %p621, %p622
      %p624 = pneg %p623
      // Predicated region
      $region73: #{tpu_custom_call.1} parent=5 // pred_check
        _
      $region74: #{tpu_custom_call.1} parent=5 // pred_check_branch
        %626 = sbr.rel (%p623) target = $region76
      $region75: #{tpu_custom_call.1} parent=5 // pred_region
        %s627 = ssub.s32 %s23, 1
        // Predicated region
        $region77: #{tpu_custom_call.1} parent=75 // pred_check
          %p628 = pneg %p44
        $region78: #{tpu_custom_call.1} parent=75 // pred_check_branch
          %630 = sbr.rel (%p628) target = $region80
        $region79: #{tpu_custom_call.1} parent=75 // pred_region
          %631 = dma.done [#allocation3], 512
        $region80: #{tpu_custom_call.1} parent=75 // pred_fallthru
          _
        // Predicated region
        $region81: #{tpu_custom_call.1} parent=75 // pred_check
          %p632 = pneg %p65
        $region82: #{tpu_custom_call.1} parent=75 // pred_check_branch
          %634 = sbr.rel (%p632) target = $region84
        $region83: #{tpu_custom_call.1} parent=75 // pred_region
          %635 = dma.done [#allocation6], 256
        $region84: #{tpu_custom_call.1} parent=75 // pred_fallthru
          _
        %s636 = sand.u32 %s28, 1
        %s637 = scalar_lea.sflag [#allocation3], %s636
        %s638 = sand.u32 %s104, 1
        %s639 = scalar_lea.vmem [#allocation7], %s638
        // Predicated region
        $region85: #{tpu_custom_call.1} parent=75 // pred_check
          %p640 = pneg %p117
        $region86: #{tpu_custom_call.1} parent=75 // pred_check_branch
          %642 = sbr.rel (%p640) target = $region88
        $region87: #{tpu_custom_call.1} parent=75 // pred_region
          %643 = dma.done %s637, 16
        $region88: #{tpu_custom_call.1} parent=75 // pred_fallthru
          _
        %s644 = sand.u32 %s28, 1
        %s645 = scalar_lea.sflag [#allocation3], %s644
        %s646 = sand.u32 %s130, 1
        %s647 = smul.addr %s646, 192
        %s648 = scalar_lea.vmem [#allocation8], %s647
        // Predicated region
        $region89: #{tpu_custom_call.1} parent=75 // pred_check
          %p649 = pneg %p143
        $region90: #{tpu_custom_call.1} parent=75 // pred_check_branch
          %651 = sbr.rel (%p649) target = $region92
        $region91: #{tpu_custom_call.1} parent=75 // pred_region
          %652 = dma.done %s645, 3072
        $region92: #{tpu_custom_call.1} parent=75 // pred_fallthru
          _
        %s653 = sand.u32 %s28, 1
        %s654 = scalar_lea.sflag [#allocation3], %s653
        %s655 = sand.u32 %s182, 1
        %s656 = smul.addr %s655, 64
        %s657 = scalar_lea.vmem [#allocation9], %s656
        // Predicated region
        $region93: #{tpu_custom_call.1} parent=75 // pred_check
          %p658 = pneg %p195
        $region94: #{tpu_custom_call.1} parent=75 // pred_check_branch
          %660 = sbr.rel (%p658) target = $region96
        $region95: #{tpu_custom_call.1} parent=75 // pred_region
          %661 = dma.done %s654, 1024
        $region96: #{tpu_custom_call.1} parent=75 // pred_fallthru
          _
        %s662 = sand.u32 %s28, 1
        %s663 = scalar_lea.sflag [#allocation3], %s662
        %s664 = sand.u32 %s208, 1
        %s665 = scalar_lea.vmem [#allocation10], %s664
        // Predicated region
        $region97: #{tpu_custom_call.1} parent=75 // pred_check
          %p666 = pneg %p221
        $region98: #{tpu_custom_call.1} parent=75 // pred_check_branch
          %668 = sbr.rel (%p666) target = $region100
        $region99: #{tpu_custom_call.1} parent=75 // pred_region
          %669 = dma.done %s663, 16
        $region100: #{tpu_custom_call.1} parent=75 // pred_fallthru
          _
        %s670 = sand.u32 %s28, 1
        %s671 = scalar_lea.sflag [#allocation3], %s670
        %s672 = sand.u32 %s234, 1
        %s673 = scalar_lea.vmem [#allocation11], %s672
        // Predicated region
        $region101: #{tpu_custom_call.1} parent=75 // pred_check
          %p674 = pneg %p247
        $region102: #{tpu_custom_call.1} parent=75 // pred_check_branch
          %676 = sbr.rel (%p674) target = $region104
        $region103: #{tpu_custom_call.1} parent=75 // pred_region
          %677 = dma.done %s671, 16
        $region104: #{tpu_custom_call.1} parent=75 // pred_fallthru
          _
        %s678 = sand.u32 %s28, 1
        %s679 = scalar_lea.sflag [#allocation3], %s678
        %s680 = sand.u32 %s260, 1
        %s681 = scalar_lea.vmem [#allocation12], %s680
        // Predicated region
        $region105: #{tpu_custom_call.1} parent=75 // pred_check
          %p682 = pneg %p273
        $region106: #{tpu_custom_call.1} parent=75 // pred_check_branch
          %684 = sbr.rel (%p682) target = $region108
        $region107: #{tpu_custom_call.1} parent=75 // pred_region
          %685 = dma.done %s679, 16
        $region108: #{tpu_custom_call.1} parent=75 // pred_fallthru
          _
        %s686 = sand.u32 %s28, 1
        %s687 = scalar_lea.sflag [#allocation3], %s686
        %s688 = sand.u32 %s286, 1
        %s689 = smul.addr %s688, 256
        %s690 = scalar_lea.vmem [#allocation13], %s689
        // Predicated region
        $region109: #{tpu_custom_call.1} parent=75 // pred_check
          %p691 = pneg %p299
        $region110: #{tpu_custom_call.1} parent=75 // pred_check_branch
          %693 = sbr.rel (%p691) target = $region112
        $region111: #{tpu_custom_call.1} parent=75 // pred_region
          %694 = dma.done %s687, 4096
        $region112: #{tpu_custom_call.1} parent=75 // pred_fallthru
          _
        %s695 = sand.u32 %s28, 1
        %s696 = scalar_lea.sflag [#allocation3], %s695
        %s697 = sand.u32 %s338, 1
        %s698 = smul.addr %s697, 256
        %s699 = scalar_lea.vmem [#allocation14], %s698
        // Predicated region
        $region113: #{tpu_custom_call.1} parent=75 // pred_check
          %p700 = pneg %p351
        $region114: #{tpu_custom_call.1} parent=75 // pred_check_branch
          %702 = sbr.rel (%p700) target = $region116
        $region115: #{tpu_custom_call.1} parent=75 // pred_region
          %703 = dma.done %s696, 4096
        $region116: #{tpu_custom_call.1} parent=75 // pred_fallthru
          _
        %p704 = pneg %p44
        %p705 = pneg %p41
        %p706 = pneg %p65
        %p707 = pneg %p62
        %p708 = scmp.lt.s32.totalorder %s28, 1
        %s709 = scalar_select %p708, %s28, 1
        %s710 = scalar_lea.vmem %s2, %s709
        %p711 = pneg %p91
        %p712 = pneg %p88
        %s713 = sand.u32 %s28, 1
        %s714 = scalar_lea.sflag [#allocation3], %s713
        %s715 = sand.u32 %s104, 1
        %s716 = scalar_lea.vmem [#allocation7], %s715
        %p717 = pneg %p117
        %p718 = pneg %p114
        %s719 = sand.u32 %s28, 1
        %s720 = scalar_lea.sflag [#allocation3], %s719
        %s721 = sand.u32 %s130, 1
        %s722 = smul.addr %s721, 192
        %s723 = scalar_lea.vmem [#allocation8], %s722
        %p724 = pneg %p143
        %p725 = pneg %p140
        %p726 = scmp.lt.s32.totalorder %s28, 1
        %s727 = scalar_select %p726, %s28, 1
        %s728 = smul.addr %s727, 3
        %s729 = scalar_lea.vmem %s5, %s728
        %p730 = pneg %p169
        %p731 = pneg %p166
        %s732 = sand.u32 %s28, 1
        %s733 = scalar_lea.sflag [#allocation3], %s732
        %s734 = sand.u32 %s182, 1
        %s735 = smul.addr %s734, 64
        %s736 = scalar_lea.vmem [#allocation9], %s735
        %p737 = pneg %p195
        %p738 = pneg %p192
        %s739 = sand.u32 %s28, 1
        %s740 = scalar_lea.sflag [#allocation3], %s739
        %s741 = sand.u32 %s208, 1
        %s742 = scalar_lea.vmem [#allocation10], %s741
        %p743 = pneg %p221
        %p744 = pneg %p218
        %s745 = sand.u32 %s28, 1
        %s746 = scalar_lea.sflag [#allocation3], %s745
        %s747 = sand.u32 %s234, 1
        %s748 = scalar_lea.vmem [#allocation11], %s747
        %p749 = pneg %p247
        %p750 = pneg %p244
        %s751 = sand.u32 %s28, 1
        %s752 = scalar_lea.sflag [#allocation3], %s751
        %s753 = sand.u32 %s260, 1
        %s754 = scalar_lea.vmem [#allocation12], %s753
        %p755 = pneg %p273
        %p756 = pneg %p270
        %s757 = sand.u32 %s28, 1
        %s758 = scalar_lea.sflag [#allocation3], %s757
        %s759 = sand.u32 %s286, 1
        %s760 = smul.addr %s759, 256
        %s761 = scalar_lea.vmem [#allocation13], %s760
        %p762 = pneg %p299
        %p763 = pneg %p296
        %p764 = scmp.lt.s32.totalorder %s28, 1
        %s765 = scalar_select %p764, %s28, 1
        %s766 = smul.addr %s765, 4
        %s767 = scalar_lea.vmem %s11, %s766
        %p768 = pneg %p325
        %p769 = pneg %p322
        %s770 = sand.u32 %s28, 1
        %s771 = scalar_lea.sflag [#allocation3], %s770
        %s772 = sand.u32 %s338, 1
        %s773 = smul.addr %s772, 256
        %s774 = scalar_lea.vmem [#allocation14], %s773
        %p775 = pneg %p351
        %p776 = pneg %p348
        %p777 = scmp.lt.s32.totalorder %s28, 1
        %s778 = scalar_select %p777, %s28, 1
        %s779 = scalar_lea.vmem %s13, %s778
        %p780 = pneg %p377
        %p781 = pneg %p374
        %p782 = pneg %p398
        %p783 = pneg %p395
        %p784 = scmp.lt.s32.totalorder %s28, 1
        %s785 = scalar_select %p784, %s28, 1
        %s786 = scalar_lea.vmem %s2, %s785
        %p787 = scmp.lt.s32.totalorder %s28, 1
        %s788 = scalar_select %p787, %s28, 1
        %s789 = smul.addr %s788, 3
        %s790 = scalar_lea.vmem %s5, %s789
        %p791 = scmp.lt.s32.totalorder %s28, 1
        %s792 = scalar_select %p791, %s28, 1
        %s793 = smul.addr %s792, 4
        %s794 = scalar_lea.vmem %s11, %s793
        %p795 = scmp.lt.s32.totalorder %s28, 1
        %s796 = scalar_select %p795, %s28, 1
        %s797 = scalar_lea.vmem %s13, %s796
        %p799 = scmp.eq.s32.totalorder %s28, 0
        // Predicated region
        $region117: #{tpu_custom_call.1} parent=75 // pred_check
          %p800 = pneg %p799
        $region118: #{tpu_custom_call.1} parent=75 // pred_check_branch
          %802 = sbr.rel (%p800) target = $region120
        $region119: #{tpu_custom_call.1} parent=75 // pred_region
          %v803 = vld [vmem:[#allocation2] sm:$0xff]
          %v804 = vld [vmem:[#allocation2 + $0x8] sm:$0xff]
          %v805 = vld [vmem:[#allocation2 + $0x10] sm:$0xff]
          %v806 = vld [vmem:[#allocation2 + $0x18] sm:$0xff]
          %807 = vst [vmem:[#allocation15] sm:$0xff] %v803
          %808 = vst [vmem:[#allocation15 + $0x8] sm:$0xff] %v804
          %809 = vst [vmem:[#allocation15 + $0x10] sm:$0xff] %v805
          %810 = vst [vmem:[#allocation15 + $0x18] sm:$0xff] %v806
        $region120: #{tpu_custom_call.1} parent=75 // pred_fallthru
          _
        %v811 = vld [vmem:[#allocation15] sm:$0xff]
        %v812 = vld [vmem:[#allocation15 + $0x8] sm:$0xff]
        %v813 = vld [vmem:[#allocation15 + $0x10] sm:$0xff]
        %v814 = vld [vmem:[#allocation15 + $0x18] sm:$0xff]
        %v815 = vld [vmem:[%s786] sm:$0x1]
        %v816 = vld [vmem:[%s639] sm:$0x1]
        %v817 = vld [vmem:[%s673] sm:$0x1]
        %v818 = vld [vmem:[%s681] sm:$0x1]
        %v819 = vld [vmem:[%s648] sm:$0xff]
        %v820 = vld [vmem:[%s648 + $0x8] sm:$0xf]
        %v821 = vld [vmem:[%s648 + $0xc] sm:$0xff]
        %v822 = vld [vmem:[%s648 + $0x14] sm:$0xf]
        %v823 = vld [vmem:[%s648 + $0x18] sm:$0xff]
        %v824 = vld [vmem:[%s648 + $0x20] sm:$0xf]
        %v825 = vld [vmem:[%s648 + $0x24] sm:$0xff]
        %v826 = vld [vmem:[%s648 + $0x2c] sm:$0xf]
        %v827 = vld [vmem:[%s648 + $0x30] sm:$0xff]
        %v828 = vld [vmem:[%s648 + $0x38] sm:$0xf]
        %v829 = vld [vmem:[%s648 + $0x3c] sm:$0xff]
        %v830 = vld [vmem:[%s648 + $0x44] sm:$0xf]
        %v831 = vld [vmem:[%s648 + $0x48] sm:$0xff]
        %v832 = vld [vmem:[%s648 + $0x50] sm:$0xf]
        %v833 = vld [vmem:[%s648 + $0x54] sm:$0xff]
        %v834 = vld [vmem:[%s648 + $0x5c] sm:$0xf]
        %v835 = vld [vmem:[%s648 + $0x60] sm:$0xff]
        %v836 = vld [vmem:[%s648 + $0x68] sm:$0xf]
        %v837 = vld [vmem:[%s648 + $0x6c] sm:$0xff]
        %v838 = vld [vmem:[%s648 + $0x74] sm:$0xf]
        %v839 = vld [vmem:[%s648 + $0x78] sm:$0xff]
        %v840 = vld [vmem:[%s648 + $0x80] sm:$0xf]
        %v841 = vld [vmem:[%s648 + $0x84] sm:$0xff]
        %v842 = vld [vmem:[%s648 + $0x8c] sm:$0xf]
        %v843 = vld [vmem:[%s648 + $0x90] sm:$0xff]
        %v844 = vld [vmem:[%s648 + $0x98] sm:$0xf]
        %v845 = vld [vmem:[%s648 + $0x9c] sm:$0xff]
        %v846 = vld [vmem:[%s648 + $0xa4] sm:$0xf]
        %v847 = vld [vmem:[%s648 + $0xa8] sm:$0xff]
        %v848 = vld [vmem:[%s648 + $0xb0] sm:$0xf]
        %v849 = vld [vmem:[%s648 + $0xb4] sm:$0xff]
        %v850 = vld [vmem:[%s648 + $0xbc] sm:$0xf]
        %v851 = vld [vmem:[%s790] sm:$0x7]
        %v852 = vld [vmem:[%s657] sm:$0xf]
        %v853 = vld [vmem:[%s657 + $0x4] sm:$0xf]
        %v854 = vld [vmem:[%s657 + $0x8] sm:$0xf]
        %v855 = vld [vmem:[%s657 + $0xc] sm:$0xf]
        %v856 = vld [vmem:[%s657 + $0x10] sm:$0xf]
        %v857 = vld [vmem:[%s657 + $0x14] sm:$0xf]
        %v858 = vld [vmem:[%s657 + $0x18] sm:$0xf]
        %v859 = vld [vmem:[%s657 + $0x1c] sm:$0xf]
        %v860 = vld [vmem:[%s657 + $0x20] sm:$0xf]
        %v861 = vld [vmem:[%s657 + $0x24] sm:$0xf]
        %v862 = vld [vmem:[%s657 + $0x28] sm:$0xf]
        %v863 = vld [vmem:[%s657 + $0x2c] sm:$0xf]
        %v864 = vld [vmem:[%s657 + $0x30] sm:$0xf]
        %v865 = vld [vmem:[%s657 + $0x34] sm:$0xf]
        %v866 = vld [vmem:[%s657 + $0x38] sm:$0xf]
        %v867 = vld [vmem:[%s657 + $0x3c] sm:$0xf]
        %v868 = vld [vmem:[%s665] sm:$0x1]
        %v869 = vld [vmem:[%s690] sm:$0xff]
        %v870 = vld [vmem:[%s690 + $0x8] sm:$0xff]
        %v871 = vld [vmem:[%s690 + $0x10] sm:$0xff]
        %v872 = vld [vmem:[%s690 + $0x18] sm:$0xff]
        %v873 = vld [vmem:[%s690 + $0x20] sm:$0xff]
        %v874 = vld [vmem:[%s690 + $0x28] sm:$0xff]
        %v875 = vld [vmem:[%s690 + $0x30] sm:$0xff]
        %v876 = vld [vmem:[%s690 + $0x38] sm:$0xff]
        %v877 = vld [vmem:[%s690 + $0x40] sm:$0xff]
        %v878 = vld [vmem:[%s690 + $0x48] sm:$0xff]
        %v879 = vld [vmem:[%s690 + $0x50] sm:$0xff]
        %v880 = vld [vmem:[%s690 + $0x58] sm:$0xff]
        %v881 = vld [vmem:[%s690 + $0x60] sm:$0xff]
        %v882 = vld [vmem:[%s690 + $0x68] sm:$0xff]
        %v883 = vld [vmem:[%s690 + $0x70] sm:$0xff]
        %v884 = vld [vmem:[%s690 + $0x78] sm:$0xff]
        %v885 = vld [vmem:[%s690 + $0x80] sm:$0xff]
        %v886 = vld [vmem:[%s690 + $0x88] sm:$0xff]
        %v887 = vld [vmem:[%s690 + $0x90] sm:$0xff]
        %v888 = vld [vmem:[%s690 + $0x98] sm:$0xff]
        %v889 = vld [vmem:[%s690 + $0xa0] sm:$0xff]
        %v890 = vld [vmem:[%s690 + $0xa8] sm:$0xff]
        %v891 = vld [vmem:[%s690 + $0xb0] sm:$0xff]
        %v892 = vld [vmem:[%s690 + $0xb8] sm:$0xff]
        %v893 = vld [vmem:[%s690 + $0xc0] sm:$0xff]
        %v894 = vld [vmem:[%s690 + $0xc8] sm:$0xff]
        %v895 = vld [vmem:[%s690 + $0xd0] sm:$0xff]
        %v896 = vld [vmem:[%s690 + $0xd8] sm:$0xff]
        %v897 = vld [vmem:[%s690 + $0xe0] sm:$0xff]
        %v898 = vld [vmem:[%s690 + $0xe8] sm:$0xff]
        %v899 = vld [vmem:[%s690 + $0xf0] sm:$0xff]
        %v900 = vld [vmem:[%s690 + $0xf8] sm:$0xff]
        %v901 = vld [vmem:[%s794] sm:$0xf]
        %v902 = vld [vmem:[%s699] sm:$0xf]
        %v903 = vld [vmem:[%s699 + $0x4] sm:$0xf]
        %v904 = vld [vmem:[%s699 + $0x8] sm:$0xf]
        %v905 = vld [vmem:[%s699 + $0xc] sm:$0xf]
        %v906 = vld [vmem:[%s699 + $0x10] sm:$0xf]
        %v907 = vld [vmem:[%s699 + $0x14] sm:$0xf]
        %v908 = vld [vmem:[%s699 + $0x18] sm:$0xf]
        %v909 = vld [vmem:[%s699 + $0x1c] sm:$0xf]
        %v910 = vld [vmem:[%s699 + $0x20] sm:$0xf]
        %v911 = vld [vmem:[%s699 + $0x24] sm:$0xf]
        %v912 = vld [vmem:[%s699 + $0x28] sm:$0xf]
        %v913 = vld [vmem:[%s699 + $0x2c] sm:$0xf]
        %v914 = vld [vmem:[%s699 + $0x30] sm:$0xf]
        %v915 = vld [vmem:[%s699 + $0x34] sm:$0xf]
        %v916 = vld [vmem:[%s699 + $0x38] sm:$0xf]
        %v917 = vld [vmem:[%s699 + $0x3c] sm:$0xf]
        %v918 = vld [vmem:[%s699 + $0x40] sm:$0xf]
        %v919 = vld [vmem:[%s699 + $0x44] sm:$0xf]
        %v920 = vld [vmem:[%s699 + $0x48] sm:$0xf]
        %v921 = vld [vmem:[%s699 + $0x4c] sm:$0xf]
        %v922 = vld [vmem:[%s699 + $0x50] sm:$0xf]
        %v923 = vld [vmem:[%s699 + $0x54] sm:$0xf]
        %v924 = vld [vmem:[%s699 + $0x58] sm:$0xf]
        %v925 = vld [vmem:[%s699 + $0x5c] sm:$0xf]
        %v926 = vld [vmem:[%s699 + $0x60] sm:$0xf]
        %v927 = vld [vmem:[%s699 + $0x64] sm:$0xf]
        %v928 = vld [vmem:[%s699 + $0x68] sm:$0xf]
        %v929 = vld [vmem:[%s699 + $0x6c] sm:$0xf]
        %v930 = vld [vmem:[%s699 + $0x70] sm:$0xf]
        %v931 = vld [vmem:[%s699 + $0x74] sm:$0xf]
        %v932 = vld [vmem:[%s699 + $0x78] sm:$0xf]
        %v933 = vld [vmem:[%s699 + $0x7c] sm:$0xf]
        %v934 = vld [vmem:[%s699 + $0x80] sm:$0xf]
        %v935 = vld [vmem:[%s699 + $0x84] sm:$0xf]
        %v936 = vld [vmem:[%s699 + $0x88] sm:$0xf]
        %v937 = vld [vmem:[%s699 + $0x8c] sm:$0xf]
        %v938 = vld [vmem:[%s699 + $0x90] sm:$0xf]
        %v939 = vld [vmem:[%s699 + $0x94] sm:$0xf]
        %v940 = vld [vmem:[%s699 + $0x98] sm:$0xf]
        %v941 = vld [vmem:[%s699 + $0x9c] sm:$0xf]
        %v942 = vld [vmem:[%s699 + $0xa0] sm:$0xf]
        %v943 = vld [vmem:[%s699 + $0xa4] sm:$0xf]
        %v944 = vld [vmem:[%s699 + $0xa8] sm:$0xf]
        %v945 = vld [vmem:[%s699 + $0xac] sm:$0xf]
        %v946 = vld [vmem:[%s699 + $0xb0] sm:$0xf]
        %v947 = vld [vmem:[%s699 + $0xb4] sm:$0xf]
        %v948 = vld [vmem:[%s699 + $0xb8] sm:$0xf]
        %v949 = vld [vmem:[%s699 + $0xbc] sm:$0xf]
        %v950 = vld [vmem:[%s699 + $0xc0] sm:$0xf]
        %v951 = vld [vmem:[%s699 + $0xc4] sm:$0xf]
        %v952 = vld [vmem:[%s699 + $0xc8] sm:$0xf]
        %v953 = vld [vmem:[%s699 + $0xcc] sm:$0xf]
        %v954 = vld [vmem:[%s699 + $0xd0] sm:$0xf]
        %v955 = vld [vmem:[%s699 + $0xd4] sm:$0xf]
        %v956 = vld [vmem:[%s699 + $0xd8] sm:$0xf]
        %v957 = vld [vmem:[%s699 + $0xdc] sm:$0xf]
        %v958 = vld [vmem:[%s699 + $0xe0] sm:$0xf]
        %v959 = vld [vmem:[%s699 + $0xe4] sm:$0xf]
        %v960 = vld [vmem:[%s699 + $0xe8] sm:$0xf]
        %v961 = vld [vmem:[%s699 + $0xec] sm:$0xf]
        %v962 = vld [vmem:[%s699 + $0xf0] sm:$0xf]
        %v963 = vld [vmem:[%s699 + $0xf4] sm:$0xf]
        %v964 = vld [vmem:[%s699 + $0xf8] sm:$0xf]
        %v965 = vld [vmem:[%s699 + $0xfc] sm:$0xf]
        %v966 = vld [vmem:[%s797] sm:$0x1]
        %v967 = vld [vmem:[#allocation5] sm:$0xff]
        %v968 = vld [vmem:[#allocation5 + $0x8] sm:$0xff]
        %969 = vadd.xlane.f32.xlu0 %v811
        %v970 = vpop.xlane.xlu0 %969
        %971 = vadd.xlane.f32.xlu0 %v812
        %v972 = vpop.xlane.xlu0 %971
        %973 = vadd.xlane.f32.xlu0 %v813
        %v974 = vpop.xlane.xlu0 %973
        %975 = vadd.xlane.f32.xlu0 %v814
        %v976 = vpop.xlane.xlu0 %975
        %v977 = vrcp.pop 128.0
        %v978 = vmul.f32 %v970, %v977
        %v979 = vmul.f32 %v972, %v977
        %v980 = vmul.f32 %v974, %v977
        %v981 = vmul.f32 %v976, %v977
        %v982 = vsub.f32 %v811, %v978
        %v983 = vsub.f32 %v812, %v979
        %v984 = vsub.f32 %v813, %v980
        %v985 = vsub.f32 %v814, %v981
        %v986 = vmul.f32 %v982, %v982
        %v987 = vmul.f32 %v983, %v983
        %v988 = vmul.f32 %v984, %v984
        %v989 = vmul.f32 %v985, %v985
        %990 = vadd.xlane.f32.xlu0 %v986
        %v991 = vpop.xlane.xlu0 %990
        %992 = vadd.xlane.f32.xlu0 %v987
        %v993 = vpop.xlane.xlu0 %992
        %994 = vadd.xlane.f32.xlu0 %v988
        %v995 = vpop.xlane.xlu0 %994
        %996 = vadd.xlane.f32.xlu0 %v989
        %v997 = vpop.xlane.xlu0 %996
        %v998 = vmul.f32 %v991, %v977
        %v999 = vmul.f32 %v993, %v977
        %v1000 = vmul.f32 %v995, %v977
        %v1001 = vmul.f32 %v997, %v977
        %v1002 = vadd.f32 %v998, 1e-05
        %v1003 = vadd.f32 %v999, 1e-05
        %v1004 = vadd.f32 %v1000, 1e-05
        %v1005 = vadd.f32 %v1001, 1e-05
        %v1006 = vrsqrt.pop %v1002
        %v1007 = vrsqrt.pop %v1003
        %v1008 = vrsqrt.pop %v1004
        %v1009 = vrsqrt.pop %v1005
        %v1010 = vmul.f32 %v982, %v1006
        %v1011 = vmul.f32 %v983, %v1007
        %v1012 = vmul.f32 %v984, %v1008
        %v1013 = vmul.f32 %v985, %v1009
        %v1015 = vlaneseq
        %v1016 = vshrl.u32 %v1015, 7
        %v1017 = vsub.s32 0, %v1016
        %v1018 = vrot.slane %v815, %v1017
        %v1020 = vmul.f32 %v1010, %v1018
        %v1021 = vmul.f32 %v1011, %v1018
        %v1022 = vmul.f32 %v1012, %v1018
        %v1023 = vmul.f32 %v1013, %v1018
        %v1025 = vlaneseq
        %v1026 = vshrl.u32 %v1025, 7
        %v1027 = vsub.s32 0, %v1026
        %v1028 = vrot.slane %v816, %v1027
        %v1030 = vadd.f32 %v1020, %v1028
        %v1031 = vadd.f32 %v1021, %v1028
        %v1032 = vadd.f32 %v1022, %v1028
        %v1033 = vadd.f32 %v1023, %v1028
        %v1034 = vpack.c.bf16 %v1031, %v1030
        %v1035 = vpack.c.bf16 %v1033, %v1032
        %v1037 = vlaneseq
        %v1038 = vshrl.u32 %v1037, 7
        %v1039 = vsub.s32 0, %v1038
        %v1040 = vrot.slane %v851, %v1039
        %v1041 = vlaneseq
        %v1042 = vshrl.u32 %v1041, 7
        %v1043 = vsub.s32 1, %v1042
        %v1044 = vrot.slane %v851, %v1043
        %v1045 = vlaneseq
        %v1046 = vshrl.u32 %v1045, 7
        %v1047 = vsub.s32 2, %v1046
        %v1048 = vrot.slane %v851, %v1047
        %v1084 = vunpack.c.l.b16 %v819
        %v1085 = vunpack.c.h.b16 %v819
        %v1086 = vunpack.c.l.b16 %v820
        %v1087 = vunpack.c.l.b16 %v821
        %v1088 = vunpack.c.h.b16 %v821
        %v1089 = vunpack.c.l.b16 %v822
        %v1090 = vunpack.c.l.b16 %v823
        %v1091 = vunpack.c.h.b16 %v823
        %v1092 = vunpack.c.l.b16 %v824
        %v1093 = vunpack.c.l.b16 %v825
        %v1094 = vunpack.c.h.b16 %v825
        %v1095 = vunpack.c.l.b16 %v826
        %v1096 = vunpack.c.l.b16 %v827
        %v1097 = vunpack.c.h.b16 %v827
        %v1098 = vunpack.c.l.b16 %v828
        %v1099 = vunpack.c.l.b16 %v829
        %v1100 = vunpack.c.h.b16 %v829
        %v1101 = vunpack.c.l.b16 %v830
        %v1102 = vunpack.c.l.b16 %v831
        %v1103 = vunpack.c.h.b16 %v831
        %v1104 = vunpack.c.l.b16 %v832
        %v1105 = vunpack.c.l.b16 %v833
        %v1106 = vunpack.c.h.b16 %v833
        %v1107 = vunpack.c.l.b16 %v834
        %v1108 = vunpack.c.l.b16 %v835
        %v1109 = vunpack.c.h.b16 %v835
        %v1110 = vunpack.c.l.b16 %v836
        %v1111 = vunpack.c.l.b16 %v837
        %v1112 = vunpack.c.h.b16 %v837
        %v1113 = vunpack.c.l.b16 %v838
        %v1114 = vunpack.c.l.b16 %v839
        %v1115 = vunpack.c.h.b16 %v839
        %v1116 = vunpack.c.l.b16 %v840
        %v1117 = vunpack.c.l.b16 %v841
        %v1118 = vunpack.c.h.b16 %v841
        %v1119 = vunpack.c.l.b16 %v842
        %v1120 = vunpack.c.l.b16 %v843
        %v1121 = vunpack.c.h.b16 %v843
        %v1122 = vunpack.c.l.b16 %v844
        %v1123 = vunpack.c.l.b16 %v845
        %v1124 = vunpack.c.h.b16 %v845
        %v1125 = vunpack.c.l.b16 %v846
        %v1126 = vunpack.c.l.b16 %v847
        %v1127 = vunpack.c.h.b16 %v847
        %v1128 = vunpack.c.l.b16 %v848
        %v1129 = vunpack.c.l.b16 %v849
        %v1130 = vunpack.c.h.b16 %v849
        %v1131 = vunpack.c.l.b16 %v850
        %v1132 = vpack.c.b16 %v1087, %v1084
        %v1133 = vpack.c.b16 %v1088, %v1085
        %v1134 = vpack.c.b16 %v1089, %v1086
        %v1135 = vpack.c.b16 %v1093, %v1090
        %v1136 = vpack.c.b16 %v1094, %v1091
        %v1137 = vpack.c.b16 %v1095, %v1092
        %v1138 = vpack.c.b16 %v1099, %v1096
        %v1139 = vpack.c.b16 %v1100, %v1097
        %v1140 = vpack.c.b16 %v1101, %v1098
        %v1141 = vpack.c.b16 %v1105, %v1102
        %v1142 = vpack.c.b16 %v1106, %v1103
        %v1143 = vpack.c.b16 %v1107, %v1104
        %v1144 = vpack.c.b16 %v1111, %v1108
        %v1145 = vpack.c.b16 %v1112, %v1109
        %v1146 = vpack.c.b16 %v1113, %v1110
        %v1147 = vpack.c.b16 %v1117, %v1114
        %v1148 = vpack.c.b16 %v1118, %v1115
        %v1149 = vpack.c.b16 %v1119, %v1116
        %v1150 = vpack.c.b16 %v1123, %v1120
        %v1151 = vpack.c.b16 %v1124, %v1121
        %v1152 = vpack.c.b16 %v1125, %v1122
        %v1153 = vpack.c.b16 %v1129, %v1126
        %v1154 = vpack.c.b16 %v1130, %v1127
        %v1155 = vpack.c.b16 %v1131, %v1128
        %1180 = vmatprep.subr.bf16.mxu0 %v1154
        %1181 = vmatpush1.bf16.msra.mxu0 %v1153
        %1182 = vmatprep.subr.bf16.mxu0 %v1151
        %1183 = vmatpush1.bf16.msra.mxu0 %v1150
        %1184 = vmatprep.subr.bf16.mxu0 %v1148
        %1185 = vmatpush1.bf16.msra.mxu0 %v1147
        %1186 = vmatprep.subr.bf16.mxu0 %v1145
        %1187 = vmatpush1.bf16.msra.mxu0 %v1144
        %1188 = vmatprep.subr.bf16.mxu0 %v1142
        %1189 = vmatpush1.bf16.msra.mxu0 %v1141
        %1190 = vmatprep.subr.bf16.mxu0 %v1139
        %1191 = vmatpush1.bf16.msra.mxu0 %v1138
        %1192 = vmatprep.subr.bf16.mxu0 %v1136
        %1193 = vmatpush1.bf16.msra.mxu0 %v1135
        %1194 = vmatprep.subr.bf16.mxu0 %v1133
        %1195 = vmatpush1.bf16.msra.mxu0 %v1132
        %1196 = vmatprep.subr.bf16.mxu0 0
        %1197 = vmatpush2.bf16.msra.mxu0 0
        %1198 = vmatprep.subr.bf16.mxu0 0
        %1199 = vmatpush2.bf16.msra.mxu0 0
        %1200 = vmatprep.subr.bf16.mxu0 0
        %1201 = vmatpush2.bf16.msra.mxu0 0
        %1202 = vmatprep.subr.bf16.mxu0 0
        %1203 = vmatpush2.bf16.msra.mxu0 0
        %1204 = vmatprep.subr.bf16.mxu0 0
        %1205 = vmatpush2.bf16.msra.mxu0 0
        %1206 = vmatprep.subr.bf16.mxu0 0
        %1207 = vmatpush2.bf16.msra.mxu0 0
        %1208 = vmatprep.subr.bf16.mxu0 0
        %1209 = vmatpush2.bf16.msra.mxu0 0
        %1210 = vmatprep.subr.bf16.mxu0 0
        %1211 = vmatpush2.bf16.msra.mxu0 0
        %1212 = vmatprep.mubr.bf16.mxu0 0
        %1213 = vmatmul.mubr.bf16.gmra.mxu0 %v1034
        %v1214 = vpop.f32.mrf.mxu0
        %v1215 = vadd.f32 %v1040, %v1214
        %v1216 = vpop.f32.mrf.mxu0
        %v1217 = vadd.f32 %v1044, %v1216
        %v1218 = vpop.f32.mrf.mxu0
        %v1219 = vadd.f32 %v1040, %v1218
        %v1220 = vpop.f32.mrf.mxu0
        %v1221 = vadd.f32 %v1044, %v1220
        %1222 = vmatprep.mubr.bf16.mxu0 0
        %1223 = vmatmul.mubr.bf16.gmra.mxu0 %v1035
        %v1224 = vpop.f32.mrf.mxu0
        %v1225 = vadd.f32 %v1040, %v1224
        %v1226 = vpop.f32.mrf.mxu0
        %v1227 = vadd.f32 %v1044, %v1226
        %v1228 = vpop.f32.mrf.mxu0
        %v1229 = vadd.f32 %v1040, %v1228
        %v1230 = vpop.f32.mrf.mxu0
        %v1231 = vadd.f32 %v1044, %v1230
        %1232 = vdwg.mxu0
        %1233 = vmatprep.subr.bf16.mxu0 0
        %1234 = vmatpush1.bf16.msra.mxu0 %v1155
        %1235 = vmatprep.subr.bf16.mxu0 0
        %1236 = vmatpush1.bf16.msra.mxu0 %v1152
        %1237 = vmatprep.subr.bf16.mxu0 0
        %1238 = vmatpush1.bf16.msra.mxu0 %v1149
        %1239 = vmatprep.subr.bf16.mxu0 0
        %1240 = vmatpush1.bf16.msra.mxu0 %v1146
        %1241 = vmatprep.subr.bf16.mxu0 0
        %1242 = vmatpush1.bf16.msra.mxu0 %v1143
        %1243 = vmatprep.subr.bf16.mxu0 0
        %1244 = vmatpush1.bf16.msra.mxu0 %v1140
        %1245 = vmatprep.subr.bf16.mxu0 0
        %1246 = vmatpush1.bf16.msra.mxu0 %v1137
        %1247 = vmatprep.subr.bf16.mxu0 0
        %1248 = vmatpush1.bf16.msra.mxu0 %v1134
        %1249 = vmatprep.subr.bf16.mxu0 0
        %1250 = vmatpush2.bf16.msra.mxu0 0
        %1251 = vmatprep.subr.bf16.mxu0 0
        %1252 = vmatpush2.bf16.msra.mxu0 0
        %1253 = vmatprep.subr.bf16.mxu0 0
        %1254 = vmatpush2.bf16.msra.mxu0 0
        %1255 = vmatprep.subr.bf16.mxu0 0
        %1256 = vmatpush2.bf16.msra.mxu0 0
        %1257 = vmatprep.subr.bf16.mxu0 0
        %1258 = vmatpush2.bf16.msra.mxu0 0
        %1259 = vmatprep.subr.bf16.mxu0 0
        %1260 = vmatpush2.bf16.msra.mxu0 0
        %1261 = vmatprep.subr.bf16.mxu0 0
        %1262 = vmatpush2.bf16.msra.mxu0 0
        %1263 = vmatprep.subr.bf16.mxu0 0
        %1264 = vmatpush2.bf16.msra.mxu0 0
        %1265 = vmatprep.mubr.bf16.mxu0 0
        %1266 = vmatmul.mubr.bf16.gmra.mxu0 %v1034
        %v1267 = vpop.f32.mrf.mxu0
        %v1268 = vadd.f32 %v1048, %v1267
        %v1269 = vpop.f32.mrf.mxu0
        %v1270 = vpop.f32.mrf.mxu0
        %v1271 = vadd.f32 %v1048, %v1270
        %v1272 = vpop.f32.mrf.mxu0
        %1273 = vmatprep.mubr.bf16.mxu0 0
        %1274 = vmatmul.mubr.bf16.gmra.mxu0 %v1035
        %v1275 = vpop.f32.mrf.mxu0
        %v1276 = vadd.f32 %v1048, %v1275
        %v1277 = vpop.f32.mrf.mxu0
        %v1278 = vpop.f32.mrf.mxu0
        %v1279 = vadd.f32 %v1048, %v1278
        %v1280 = vpop.f32.mrf.mxu0
        %1281 = vdwg.mxu0
        %v1282 = vmul.f32 %v1215, 0.125
        %v1283 = vmul.f32 %v1219, 0.125
        %v1284 = vmul.f32 %v1225, 0.125
        %v1285 = vmul.f32 %v1229, 0.125
        %v1286 = vpack.c.bf16 %v1283, %v1282
        %v1287 = vpack.c.bf16 %v1285, %v1284
        %v1288 = vpack.c.bf16 %v1221, %v1217
        %v1289 = vpack.c.bf16 %v1231, %v1227
        %v1290 = vpack.c.bf16 %v1271, %v1268
        %v1291 = vpack.c.bf16 %v1279, %v1276
        %1294 = vrot.lane.b32.xlu0 %v1286, 64
        %v1295 = vpop.permute.xlu0 %1294
        %1296 = vrot.lane.b32.xlu0 %v1287, 64
        %v1297 = vpop.permute.xlu0 %1296
        %1300 = vrot.lane.b32.xlu0 %v1288, 64
        %v1301 = vpop.permute.xlu0 %1300
        %1302 = vrot.lane.b32.xlu0 %v1289, 64
        %v1303 = vpop.permute.xlu0 %1302
        %1306 = vrot.lane.b32.xlu0 %v1290, 64
        %v1307 = vpop.permute.xlu0 %1306
        %1308 = vrot.lane.b32.xlu0 %v1291, 64
        %v1309 = vpop.permute.xlu0 %1308
        %vm1312 = vcmask 523264
        %v1314 = vsel %vm1312, %v1286, 0
        %v1317 = vsel %vm1312, %v1288, 0
        %1319 = vmatprep.subr.bf16.mxu0 0
        %1320 = vmatpush1.bf16.xpose.msra.mxu0 0
        %1321 = vmatprep.subr.bf16.mxu0 0
        %1322 = vmatpush1.bf16.xpose.msra.mxu0 0
        %1323 = vmatprep.subr.bf16.mxu0 0
        %1324 = vmatpush1.bf16.xpose.msra.mxu0 0
        %1325 = vmatprep.subr.bf16.mxu0 0
        %1326 = vmatpush1.bf16.xpose.msra.mxu0 0
        %1327 = vmatprep.subr.bf16.mxu0 0
        %1328 = vmatpush1.bf16.xpose.msra.mxu0 0
        %1329 = vmatprep.subr.bf16.mxu0 0
        %1330 = vmatpush1.bf16.xpose.msra.mxu0 0
        %1331 = vmatprep.subr.bf16.mxu0 0
        %1332 = vmatpush1.bf16.xpose.msra.mxu0 0
        %1333 = vmatprep.subr.bf16.mxu0 0
        %1334 = vmatpush1.bf16.xpose.msra.mxu0 %v1317
        %1335 = vmatprep.subr.bf16.mxu0 0
        %1336 = vmatpush2.bf16.xpose.msra.mxu0 0
        %1337 = vmatprep.subr.bf16.mxu0 0
        %1338 = vmatpush2.bf16.xpose.msra.mxu0 0
        %1339 = vmatprep.subr.bf16.mxu0 0
        %1340 = vmatpush2.bf16.xpose.msra.mxu0 0
        %1341 = vmatprep.subr.bf16.mxu0 0
        %1342 = vmatpush2.bf16.xpose.msra.mxu0 0
        %1343 = vmatprep.subr.bf16.mxu0 0
        %1344 = vmatpush2.bf16.xpose.msra.mxu0 0
        %1345 = vmatprep.subr.bf16.mxu0 0
        %1346 = vmatpush2.bf16.xpose.msra.mxu0 0
        %1347 = vmatprep.subr.bf16.mxu0 0
        %1348 = vmatpush2.bf16.xpose.msra.mxu0 0
        %1349 = vmatprep.subr.bf16.mxu0 0
        %1350 = vmatpush2.bf16.xpose.msra.mxu0 0
        %1351 = vmatprep.mubr.bf16.mxu0 0
        %1352 = vmatmul.mubr.bf16.gmra.mxu0 %v1314
        %v1353 = vpop.f32.mrf.mxu0
        %v1354 = vadd.f32 %v967, %v1353
        %v1355 = vpop.f32.mrf.mxu0
        %v1356 = vpop.f32.mrf.mxu0
        %v1357 = vadd.f32 %v968, %v1356
        %v1358 = vpop.f32.mrf.mxu0
        %1359 = vdwg.mxu0
        %v1361 = vsel %vm1312, %v1287, 0
        %v1364 = vsel %vm1312, %v1289, 0
        %1366 = vmatprep.subr.bf16.mxu0 0
        %1367 = vmatpush1.bf16.xpose.msra.mxu0 0
        %1368 = vmatprep.subr.bf16.mxu0 0
        %1369 = vmatpush1.bf16.xpose.msra.mxu0 0
        %1370 = vmatprep.subr.bf16.mxu0 0
        %1371 = vmatpush1.bf16.xpose.msra.mxu0 0
        %1372 = vmatprep.subr.bf16.mxu0 0
        %1373 = vmatpush1.bf16.xpose.msra.mxu0 0
        %1374 = vmatprep.subr.bf16.mxu0 0
        %1375 = vmatpush1.bf16.xpose.msra.mxu0 0
        %1376 = vmatprep.subr.bf16.mxu0 0
        %1377 = vmatpush1.bf16.xpose.msra.mxu0 0
        %1378 = vmatprep.subr.bf16.mxu0 0
        %1379 = vmatpush1.bf16.xpose.msra.mxu0 0
        %1380 = vmatprep.subr.bf16.mxu0 0
        %1381 = vmatpush1.bf16.xpose.msra.mxu0 %v1364
        %1382 = vmatprep.subr.bf16.mxu0 0
        %1383 = vmatpush2.bf16.xpose.msra.mxu0 0
        %1384 = vmatprep.subr.bf16.mxu0 0
        %1385 = vmatpush2.bf16.xpose.msra.mxu0 0
        %1386 = vmatprep.subr.bf16.mxu0 0
        %1387 = vmatpush2.bf16.xpose.msra.mxu0 0
        %1388 = vmatprep.subr.bf16.mxu0 0
        %1389 = vmatpush2.bf16.xpose.msra.mxu0 0
        %1390 = vmatprep.subr.bf16.mxu0 0
        %1391 = vmatpush2.bf16.xpose.msra.mxu0 0
        %1392 = vmatprep.subr.bf16.mxu0 0
        %1393 = vmatpush2.bf16.xpose.msra.mxu0 0
        %1394 = vmatprep.subr.bf16.mxu0 0
        %1395 = vmatpush2.bf16.xpose.msra.mxu0 0
        %1396 = vmatprep.subr.bf16.mxu0 0
        %1397 = vmatpush2.bf16.xpose.msra.mxu0 0
        %1398 = vmatprep.mubr.bf16.mxu0 0
        %1399 = vmatmul.mubr.bf16.gmra.mxu0 %v1361
        %v1400 = vpop.f32.mrf.mxu0
        %v1401 = vadd.f32 %v967, %v1400
        %v1402 = vpop.f32.mrf.mxu0
        %v1403 = vpop.f32.mrf.mxu0
        %v1404 = vadd.f32 %v968, %v1403
        %v1405 = vpop.f32.mrf.mxu0
        %1406 = vdwg.mxu0
        %v1408 = vsel %vm1312, %v1295, 0
        %v1411 = vsel %vm1312, %v1301, 0
        %1413 = vmatprep.subr.bf16.mxu0 0
        %1414 = vmatpush1.bf16.xpose.msra.mxu0 0
        %1415 = vmatprep.subr.bf16.mxu0 0
        %1416 = vmatpush1.bf16.xpose.msra.mxu0 0
        %1417 = vmatprep.subr.bf16.mxu0 0
        %1418 = vmatpush1.bf16.xpose.msra.mxu0 0
        %1419 = vmatprep.subr.bf16.mxu0 0
        %1420 = vmatpush1.bf16.xpose.msra.mxu0 0
        %1421 = vmatprep.subr.bf16.mxu0 0
        %1422 = vmatpush1.bf16.xpose.msra.mxu0 0
        %1423 = vmatprep.subr.bf16.mxu0 0
        %1424 = vmatpush1.bf16.xpose.msra.mxu0 0
        %1425 = vmatprep.subr.bf16.mxu0 0
        %1426 = vmatpush1.bf16.xpose.msra.mxu0 0
        %1427 = vmatprep.subr.bf16.mxu0 0
        %1428 = vmatpush1.bf16.xpose.msra.mxu0 %v1411
        %1429 = vmatprep.subr.bf16.mxu0 0
        %1430 = vmatpush2.bf16.xpose.msra.mxu0 0
        %1431 = vmatprep.subr.bf16.mxu0 0
        %1432 = vmatpush2.bf16.xpose.msra.mxu0 0
        %1433 = vmatprep.subr.bf16.mxu0 0
        %1434 = vmatpush2.bf16.xpose.msra.mxu0 0
        %1435 = vmatprep.subr.bf16.mxu0 0
        %1436 = vmatpush2.bf16.xpose.msra.mxu0 0
        %1437 = vmatprep.subr.bf16.mxu0 0
        %1438 = vmatpush2.bf16.xpose.msra.mxu0 0
        %1439 = vmatprep.subr.bf16.mxu0 0
        %1440 = vmatpush2.bf16.xpose.msra.mxu0 0
        %1441 = vmatprep.subr.bf16.mxu0 0
        %1442 = vmatpush2.bf16.xpose.msra.mxu0 0
        %1443 = vmatprep.subr.bf16.mxu0 0
        %1444 = vmatpush2.bf16.xpose.msra.mxu0 0
        %1445 = vmatprep.mubr.bf16.mxu0 0
        %1446 = vmatmul.mubr.bf16.gmra.mxu0 %v1408
        %v1447 = vpop.f32.mrf.mxu0
        %v1448 = vadd.f32 %v967, %v1447
        %v1449 = vpop.f32.mrf.mxu0
        %v1450 = vpop.f32.mrf.mxu0
        %v1451 = vadd.f32 %v968, %v1450
        %v1452 = vpop.f32.mrf.mxu0
        %1453 = vdwg.mxu0
        %v1455 = vsel %vm1312, %v1297, 0
        %v1458 = vsel %vm1312, %v1303, 0
        %1460 = vmatprep.subr.bf16.mxu0 0
        %1461 = vmatpush1.bf16.xpose.msra.mxu0 0
        %1462 = vmatprep.subr.bf16.mxu0 0
        %1463 = vmatpush1.bf16.xpose.msra.mxu0 0
        %1464 = vmatprep.subr.bf16.mxu0 0
        %1465 = vmatpush1.bf16.xpose.msra.mxu0 0
        %1466 = vmatprep.subr.bf16.mxu0 0
        %1467 = vmatpush1.bf16.xpose.msra.mxu0 0
        %1468 = vmatprep.subr.bf16.mxu0 0
        %1469 = vmatpush1.bf16.xpose.msra.mxu0 0
        %1470 = vmatprep.subr.bf16.mxu0 0
        %1471 = vmatpush1.bf16.xpose.msra.mxu0 0
        %1472 = vmatprep.subr.bf16.mxu0 0
        %1473 = vmatpush1.bf16.xpose.msra.mxu0 0
        %1474 = vmatprep.subr.bf16.mxu0 0
        %1475 = vmatpush1.bf16.xpose.msra.mxu0 %v1458
        %1476 = vmatprep.subr.bf16.mxu0 0
        %1477 = vmatpush2.bf16.xpose.msra.mxu0 0
        %1478 = vmatprep.subr.bf16.mxu0 0
        %1479 = vmatpush2.bf16.xpose.msra.mxu0 0
        %1480 = vmatprep.subr.bf16.mxu0 0
        %1481 = vmatpush2.bf16.xpose.msra.mxu0 0
        %1482 = vmatprep.subr.bf16.mxu0 0
        %1483 = vmatpush2.bf16.xpose.msra.mxu0 0
        %1484 = vmatprep.subr.bf16.mxu0 0
        %1485 = vmatpush2.bf16.xpose.msra.mxu0 0
        %1486 = vmatprep.subr.bf16.mxu0 0
        %1487 = vmatpush2.bf16.xpose.msra.mxu0 0
        %1488 = vmatprep.subr.bf16.mxu0 0
        %1489 = vmatpush2.bf16.xpose.msra.mxu0 0
        %1490 = vmatprep.subr.bf16.mxu0 0
        %1491 = vmatpush2.bf16.xpose.msra.mxu0 0
        %1492 = vmatprep.mubr.bf16.mxu0 0
        %1493 = vmatmul.mubr.bf16.gmra.mxu0 %v1455
        %v1494 = vpop.f32.mrf.mxu0
        %v1495 = vadd.f32 %v967, %v1494
        %v1496 = vpop.f32.mrf.mxu0
        %v1497 = vpop.f32.mrf.mxu0
        %v1498 = vadd.f32 %v968, %v1497
        %v1499 = vpop.f32.mrf.mxu0
        %1500 = vdwg.mxu0
        %vm1501 = vcmask 130048
        %v1502 = vsel %vm1501, %v1354, -inf
        %1503 = vmax.xlane.f32.xlu0 %v1502
        %v1504 = vpop.xlane.xlu0 %1503
        %v1505 = vsel %vm1501, %v1357, -inf
        %1506 = vmax.xlane.f32.xlu0 %v1505
        %v1507 = vpop.xlane.xlu0 %1506
        %v1508 = vsel %vm1501, %v1401, -inf
        %1509 = vmax.xlane.f32.xlu0 %v1508
        %v1510 = vpop.xlane.xlu0 %1509
        %v1511 = vsel %vm1501, %v1404, -inf
        %1512 = vmax.xlane.f32.xlu0 %v1511
        %v1513 = vpop.xlane.xlu0 %1512
        %v1514 = vsel %vm1501, %v1448, -inf
        %1515 = vmax.xlane.f32.xlu0 %v1514
        %v1516 = vpop.xlane.xlu0 %1515
        %v1517 = vsel %vm1501, %v1451, -inf
        %1518 = vmax.xlane.f32.xlu0 %v1517
        %v1519 = vpop.xlane.xlu0 %1518
        %v1520 = vsel %vm1501, %v1495, -inf
        %1521 = vmax.xlane.f32.xlu0 %v1520
        %v1522 = vpop.xlane.xlu0 %1521
        %v1523 = vsel %vm1501, %v1498, -inf
        %1524 = vmax.xlane.f32.xlu0 %v1523
        %v1525 = vpop.xlane.xlu0 %1524
        %v1526 = vsub.f32 %v1354, %v1504
        %v1527 = vsub.f32 %v1357, %v1507
        %v1528 = vsub.f32 %v1401, %v1510
        %v1529 = vsub.f32 %v1404, %v1513
        %v1530 = vsub.f32 %v1448, %v1516
        %v1531 = vsub.f32 %v1451, %v1519
        %v1532 = vsub.f32 %v1495, %v1522
        %v1533 = vsub.f32 %v1498, %v1525
        %v1534 = vmul.f32 %v1526, 1.442695
        %v1535 = vpow.pop %v1534
        %v1536 = vmul.f32 %v1527, 1.442695
        %v1537 = vpow.pop %v1536
        %v1538 = vmul.f32 %v1528, 1.442695
        %v1539 = vpow.pop %v1538
        %v1540 = vmul.f32 %v1529, 1.442695
        %v1541 = vpow.pop %v1540
        %v1542 = vmul.f32 %v1530, 1.442695
        %v1543 = vpow.pop %v1542
        %v1544 = vmul.f32 %v1531, 1.442695
        %v1545 = vpow.pop %v1544
        %v1546 = vmul.f32 %v1532, 1.442695
        %v1547 = vpow.pop %v1546
        %v1548 = vmul.f32 %v1533, 1.442695
        %v1549 = vpow.pop %v1548
        %v1550 = vsel %vm1501, %v1535, 0.0
        %1551 = vadd.xlane.f32.xlu0 %v1550
        %v1552 = vpop.xlane.xlu0 %1551
        %v1553 = vsel %vm1501, %v1537, 0.0
        %1554 = vadd.xlane.f32.xlu0 %v1553
        %v1555 = vpop.xlane.xlu0 %1554
        %v1556 = vsel %vm1501, %v1539, 0.0
        %1557 = vadd.xlane.f32.xlu0 %v1556
        %v1558 = vpop.xlane.xlu0 %1557
        %v1559 = vsel %vm1501, %v1541, 0.0
        %1560 = vadd.xlane.f32.xlu0 %v1559
        %v1561 = vpop.xlane.xlu0 %1560
        %v1562 = vsel %vm1501, %v1543, 0.0
        %1563 = vadd.xlane.f32.xlu0 %v1562
        %v1564 = vpop.xlane.xlu0 %1563
        %v1565 = vsel %vm1501, %v1545, 0.0
        %1566 = vadd.xlane.f32.xlu0 %v1565
        %v1567 = vpop.xlane.xlu0 %1566
        %v1568 = vsel %vm1501, %v1547, 0.0
        %1569 = vadd.xlane.f32.xlu0 %v1568
        %v1570 = vpop.xlane.xlu0 %1569
        %v1571 = vsel %vm1501, %v1549, 0.0
        %1572 = vadd.xlane.f32.xlu0 %v1571
        %v1573 = vpop.xlane.xlu0 %1572
        %v1574 = vrcp.pop %v1552
        %v1575 = vrcp.pop %v1555
        %v1576 = vrcp.pop %v1558
        %v1577 = vrcp.pop %v1561
        %v1578 = vrcp.pop %v1564
        %v1579 = vrcp.pop %v1567
        %v1580 = vrcp.pop %v1570
        %v1581 = vrcp.pop %v1573
        %v1582 = vmul.f32 %v1535, %v1574
        %v1583 = vmul.f32 %v1537, %v1575
        %v1584 = vmul.f32 %v1539, %v1576
        %v1585 = vmul.f32 %v1541, %v1577
        %v1586 = vmul.f32 %v1543, %v1578
        %v1587 = vmul.f32 %v1545, %v1579
        %v1588 = vmul.f32 %v1547, %v1580
        %v1589 = vmul.f32 %v1549, %v1581
        %v1590 = vpack.c.bf16 %v1583, %v1582
        %v1591 = vpack.c.bf16 %v1585, %v1584
        %v1592 = vpack.c.bf16 %v1587, %v1586
        %v1593 = vpack.c.bf16 %v1589, %v1588
        %v1595 = vsel %vm1501, %v1590, 0
        %1597 = vmatprep.subr.bf16.mxu0 0
        %1598 = vmatpush1.bf16.msra.mxu0 0
        %1599 = vmatprep.subr.bf16.mxu0 0
        %1600 = vmatpush1.bf16.msra.mxu0 0
        %1601 = vmatprep.subr.bf16.mxu0 0
        %1602 = vmatpush1.bf16.msra.mxu0 0
        %1603 = vmatprep.subr.bf16.mxu0 0
        %1604 = vmatpush1.bf16.msra.mxu0 0
        %1605 = vmatprep.subr.bf16.mxu0 0
        %1606 = vmatpush1.bf16.msra.mxu0 0
        %1607 = vmatprep.subr.bf16.mxu0 0
        %1608 = vmatpush1.bf16.msra.mxu0 0
        %1609 = vmatprep.subr.bf16.mxu0 0
        %1610 = vmatpush1.bf16.msra.mxu0 0
        %1611 = vmatprep.subr.bf16.mxu0 0
        %1612 = vmatpush1.bf16.msra.mxu0 %v1290
        %1613 = vmatprep.subr.bf16.mxu0 0
        %1614 = vmatpush2.bf16.msra.mxu0 0
        %1615 = vmatprep.subr.bf16.mxu0 0
        %1616 = vmatpush2.bf16.msra.mxu0 0
        %1617 = vmatprep.subr.bf16.mxu0 0
        %1618 = vmatpush2.bf16.msra.mxu0 0
        %1619 = vmatprep.subr.bf16.mxu0 0
        %1620 = vmatpush2.bf16.msra.mxu0 0
        %1621 = vmatprep.subr.bf16.mxu0 0
        %1622 = vmatpush2.bf16.msra.mxu0 0
        %1623 = vmatprep.subr.bf16.mxu0 0
        %1624 = vmatpush2.bf16.msra.mxu0 0
        %1625 = vmatprep.subr.bf16.mxu0 0
        %1626 = vmatpush2.bf16.msra.mxu0 0
        %1627 = vmatprep.subr.bf16.mxu0 0
        %1628 = vmatpush2.bf16.msra.mxu0 0
        %1629 = vmatprep.mubr.bf16.mxu0 0
        %1630 = vmatmul.mubr.bf16.gmra.mxu0 %v1595
        %v1631 = vpop.f32.mrf.mxu0
        %v1632 = vadd.f32 0.0, %v1631
        %v1633 = vpop.f32.mrf.mxu0
        %v1634 = vpop.f32.mrf.mxu0
        %v1635 = vadd.f32 0.0, %v1634
        %v1636 = vpop.f32.mrf.mxu0
        %1637 = vdwg.mxu0
        %v1639 = vsel %vm1501, %v1591, 0
        %1641 = vmatprep.subr.bf16.mxu0 0
        %1642 = vmatpush1.bf16.msra.mxu0 0
        %1643 = vmatprep.subr.bf16.mxu0 0
        %1644 = vmatpush1.bf16.msra.mxu0 0
        %1645 = vmatprep.subr.bf16.mxu0 0
        %1646 = vmatpush1.bf16.msra.mxu0 0
        %1647 = vmatprep.subr.bf16.mxu0 0
        %1648 = vmatpush1.bf16.msra.mxu0 0
        %1649 = vmatprep.subr.bf16.mxu0 0
        %1650 = vmatpush1.bf16.msra.mxu0 0
        %1651 = vmatprep.subr.bf16.mxu0 0
        %1652 = vmatpush1.bf16.msra.mxu0 0
        %1653 = vmatprep.subr.bf16.mxu0 0
        %1654 = vmatpush1.bf16.msra.mxu0 0
        %1655 = vmatprep.subr.bf16.mxu0 0
        %1656 = vmatpush1.bf16.msra.mxu0 %v1291
        %1657 = vmatprep.subr.bf16.mxu0 0
        %1658 = vmatpush2.bf16.msra.mxu0 0
        %1659 = vmatprep.subr.bf16.mxu0 0
        %1660 = vmatpush2.bf16.msra.mxu0 0
        %1661 = vmatprep.subr.bf16.mxu0 0
        %1662 = vmatpush2.bf16.msra.mxu0 0
        %1663 = vmatprep.subr.bf16.mxu0 0
        %1664 = vmatpush2.bf16.msra.mxu0 0
        %1665 = vmatprep.subr.bf16.mxu0 0
        %1666 = vmatpush2.bf16.msra.mxu0 0
        %1667 = vmatprep.subr.bf16.mxu0 0
        %1668 = vmatpush2.bf16.msra.mxu0 0
        %1669 = vmatprep.subr.bf16.mxu0 0
        %1670 = vmatpush2.bf16.msra.mxu0 0
        %1671 = vmatprep.subr.bf16.mxu0 0
        %1672 = vmatpush2.bf16.msra.mxu0 0
        %1673 = vmatprep.mubr.bf16.mxu0 0
        %1674 = vmatmul.mubr.bf16.gmra.mxu0 %v1639
        %v1675 = vpop.f32.mrf.mxu0
        %v1676 = vadd.f32 0.0, %v1675
        %v1677 = vpop.f32.mrf.mxu0
        %v1678 = vpop.f32.mrf.mxu0
        %v1679 = vadd.f32 0.0, %v1678
        %v1680 = vpop.f32.mrf.mxu0
        %1681 = vdwg.mxu0
        %v1683 = vsel %vm1501, %v1592, 0
        %1685 = vmatprep.subr.bf16.mxu0 0
        %1686 = vmatpush1.bf16.msra.mxu0 0
        %1687 = vmatprep.subr.bf16.mxu0 0
        %1688 = vmatpush1.bf16.msra.mxu0 0
        %1689 = vmatprep.subr.bf16.mxu0 0
        %1690 = vmatpush1.bf16.msra.mxu0 0
        %1691 = vmatprep.subr.bf16.mxu0 0
        %1692 = vmatpush1.bf16.msra.mxu0 0
        %1693 = vmatprep.subr.bf16.mxu0 0
        %1694 = vmatpush1.bf16.msra.mxu0 0
        %1695 = vmatprep.subr.bf16.mxu0 0
        %1696 = vmatpush1.bf16.msra.mxu0 0
        %1697 = vmatprep.subr.bf16.mxu0 0
        %1698 = vmatpush1.bf16.msra.mxu0 0
        %1699 = vmatprep.subr.bf16.mxu0 0
        %1700 = vmatpush1.bf16.msra.mxu0 %v1307
        %1701 = vmatprep.subr.bf16.mxu0 0
        %1702 = vmatpush2.bf16.msra.mxu0 0
        %1703 = vmatprep.subr.bf16.mxu0 0
        %1704 = vmatpush2.bf16.msra.mxu0 0
        %1705 = vmatprep.subr.bf16.mxu0 0
        %1706 = vmatpush2.bf16.msra.mxu0 0
        %1707 = vmatprep.subr.bf16.mxu0 0
        %1708 = vmatpush2.bf16.msra.mxu0 0
        %1709 = vmatprep.subr.bf16.mxu0 0
        %1710 = vmatpush2.bf16.msra.mxu0 0
        %1711 = vmatprep.subr.bf16.mxu0 0
        %1712 = vmatpush2.bf16.msra.mxu0 0
        %1713 = vmatprep.subr.bf16.mxu0 0
        %1714 = vmatpush2.bf16.msra.mxu0 0
        %1715 = vmatprep.subr.bf16.mxu0 0
        %1716 = vmatpush2.bf16.msra.mxu0 0
        %1717 = vmatprep.mubr.bf16.mxu0 0
        %1718 = vmatmul.mubr.bf16.gmra.mxu0 %v1683
        %v1719 = vpop.f32.mrf.mxu0
        %v1720 = vadd.f32 0.0, %v1719
        %v1721 = vpop.f32.mrf.mxu0
        %v1722 = vpop.f32.mrf.mxu0
        %v1723 = vadd.f32 0.0, %v1722
        %v1724 = vpop.f32.mrf.mxu0
        %1725 = vdwg.mxu0
        %v1727 = vsel %vm1501, %v1593, 0
        %1729 = vmatprep.subr.bf16.mxu0 0
        %1730 = vmatpush1.bf16.msra.mxu0 0
        %1731 = vmatprep.subr.bf16.mxu0 0
        %1732 = vmatpush1.bf16.msra.mxu0 0
        %1733 = vmatprep.subr.bf16.mxu0 0
        %1734 = vmatpush1.bf16.msra.mxu0 0
        %1735 = vmatprep.subr.bf16.mxu0 0
        %1736 = vmatpush1.bf16.msra.mxu0 0
        %1737 = vmatprep.subr.bf16.mxu0 0
        %1738 = vmatpush1.bf16.msra.mxu0 0
        %1739 = vmatprep.subr.bf16.mxu0 0
        %1740 = vmatpush1.bf16.msra.mxu0 0
        %1741 = vmatprep.subr.bf16.mxu0 0
        %1742 = vmatpush1.bf16.msra.mxu0 0
        %1743 = vmatprep.subr.bf16.mxu0 0
        %1744 = vmatpush1.bf16.msra.mxu0 %v1309
        %1745 = vmatprep.subr.bf16.mxu0 0
        %1746 = vmatpush2.bf16.msra.mxu0 0
        %1747 = vmatprep.subr.bf16.mxu0 0
        %1748 = vmatpush2.bf16.msra.mxu0 0
        %1749 = vmatprep.subr.bf16.mxu0 0
        %1750 = vmatpush2.bf16.msra.mxu0 0
        %1751 = vmatprep.subr.bf16.mxu0 0
        %1752 = vmatpush2.bf16.msra.mxu0 0
        %1753 = vmatprep.subr.bf16.mxu0 0
        %1754 = vmatpush2.bf16.msra.mxu0 0
        %1755 = vmatprep.subr.bf16.mxu0 0
        %1756 = vmatpush2.bf16.msra.mxu0 0
        %1757 = vmatprep.subr.bf16.mxu0 0
        %1758 = vmatpush2.bf16.msra.mxu0 0
        %1759 = vmatprep.subr.bf16.mxu0 0
        %1760 = vmatpush2.bf16.msra.mxu0 0
        %1761 = vmatprep.mubr.bf16.mxu0 0
        %1762 = vmatmul.mubr.bf16.gmra.mxu0 %v1727
        %v1763 = vpop.f32.mrf.mxu0
        %v1764 = vadd.f32 0.0, %v1763
        %v1765 = vpop.f32.mrf.mxu0
        %v1766 = vpop.f32.mrf.mxu0
        %v1767 = vadd.f32 0.0, %v1766
        %v1768 = vpop.f32.mrf.mxu0
        %1769 = vdwg.mxu0
        %v1770 = vpack.c.bf16 %v1635, %v1632
        %v1771 = vpack.c.bf16 %v1679, %v1676
        %v1772 = vpack.c.bf16 %v1723, %v1720
        %v1773 = vpack.c.bf16 %v1767, %v1764
        %1776 = vrot.lane.b32.xlu0 %v1772, 64
        %v1777 = vpop.permute.xlu0 %1776
        %1778 = vrot.lane.b32.xlu0 %v1773, 64
        %v1779 = vpop.permute.xlu0 %1778
        %v1782 = vsel %vm1312, %v1770, %v1777
        %v1786 = vsel %vm1312, %v1771, %v1779
        %v1789 = vlaneseq
        %v1790 = vshrl.u32 %v1789, 7
        %v1791 = vsub.s32 0, %v1790
        %v1792 = vrot.slane %v868, %v1791
        %v1810 = vunpack.c.l.b16 %v852
        %v1811 = vunpack.c.l.b16 %v853
        %v1812 = vunpack.c.l.b16 %v854
        %v1813 = vunpack.c.l.b16 %v855
        %v1814 = vunpack.c.l.b16 %v856
        %v1815 = vunpack.c.l.b16 %v857
        %v1816 = vunpack.c.l.b16 %v858
        %v1817 = vunpack.c.l.b16 %v859
        %v1818 = vunpack.c.l.b16 %v860
        %v1819 = vunpack.c.l.b16 %v861
        %v1820 = vunpack.c.l.b16 %v862
        %v1821 = vunpack.c.l.b16 %v863
        %v1822 = vunpack.c.l.b16 %v864
        %v1823 = vunpack.c.l.b16 %v865
        %v1824 = vunpack.c.l.b16 %v866
        %v1825 = vunpack.c.l.b16 %v867
        %v1826 = vpack.c.b16 %v1811, %v1810
        %v1827 = vpack.c.b16 %v1813, %v1812
        %v1828 = vpack.c.b16 %v1815, %v1814
        %v1829 = vpack.c.b16 %v1817, %v1816
        %v1830 = vpack.c.b16 %v1819, %v1818
        %v1831 = vpack.c.b16 %v1821, %v1820
        %v1832 = vpack.c.b16 %v1823, %v1822
        %v1833 = vpack.c.b16 %v1825, %v1824
        %1842 = vmatprep.subr.bf16.mxu0 0
        %1843 = vmatpush1.bf16.msra.mxu0 %v1833
        %1844 = vmatprep.subr.bf16.mxu0 0
        %1845 = vmatpush1.bf16.msra.mxu0 %v1832
        %1846 = vmatprep.subr.bf16.mxu0 0
        %1847 = vmatpush1.bf16.msra.mxu0 %v1831
        %1848 = vmatprep.subr.bf16.mxu0 0
        %1849 = vmatpush1.bf16.msra.mxu0 %v1830
        %1850 = vmatprep.subr.bf16.mxu0 0
        %1851 = vmatpush1.bf16.msra.mxu0 %v1829
        %1852 = vmatprep.subr.bf16.mxu0 0
        %1853 = vmatpush1.bf16.msra.mxu0 %v1828
        %1854 = vmatprep.subr.bf16.mxu0 0
        %1855 = vmatpush1.bf16.msra.mxu0 %v1827
        %1856 = vmatprep.subr.bf16.mxu0 0
        %1857 = vmatpush1.bf16.msra.mxu0 %v1826
        %1858 = vmatprep.subr.bf16.mxu0 0
        %1859 = vmatpush2.bf16.msra.mxu0 0
        %1860 = vmatprep.subr.bf16.mxu0 0
        %1861 = vmatpush2.bf16.msra.mxu0 0
        %1862 = vmatprep.subr.bf16.mxu0 0
        %1863 = vmatpush2.bf16.msra.mxu0 0
        %1864 = vmatprep.subr.bf16.mxu0 0
        %1865 = vmatpush2.bf16.msra.mxu0 0
        %1866 = vmatprep.subr.bf16.mxu0 0
        %1867 = vmatpush2.bf16.msra.mxu0 0
        %1868 = vmatprep.subr.bf16.mxu0 0
        %1869 = vmatpush2.bf16.msra.mxu0 0
        %1870 = vmatprep.subr.bf16.mxu0 0
        %1871 = vmatpush2.bf16.msra.mxu0 0
        %1872 = vmatprep.subr.bf16.mxu0 0
        %1873 = vmatpush2.bf16.msra.mxu0 0
        %1874 = vmatprep.mubr.bf16.mxu0 0
        %1875 = vmatmul.mubr.bf16.gmra.mxu0 %v1782
        %v1876 = vpop.f32.mrf.mxu0
        %v1877 = vadd.f32 %v1792, %v1876
        %v1878 = vpop.f32.mrf.mxu0
        %v1879 = vpop.f32.mrf.mxu0
        %v1880 = vadd.f32 %v1792, %v1879
        %v1881 = vpop.f32.mrf.mxu0
        %1882 = vmatprep.mubr.bf16.mxu0 0
        %1883 = vmatmul.mubr.bf16.gmra.mxu0 %v1786
        %v1884 = vpop.f32.mrf.mxu0
        %v1885 = vadd.f32 %v1792, %v1884
        %v1886 = vpop.f32.mrf.mxu0
        %v1887 = vpop.f32.mrf.mxu0
        %v1888 = vadd.f32 %v1792, %v1887
        %v1889 = vpop.f32.mrf.mxu0
        %1890 = vdwg.mxu0
        %v1891 = vadd.f32 %v811, %v1877
        %v1892 = vadd.f32 %v812, %v1880
        %v1893 = vadd.f32 %v813, %v1885
        %v1894 = vadd.f32 %v814, %v1888
        %1895 = vadd.xlane.f32.xlu0 %v1891
        %v1896 = vpop.xlane.xlu0 %1895
        %1897 = vadd.xlane.f32.xlu0 %v1892
        %v1898 = vpop.xlane.xlu0 %1897
        %1899 = vadd.xlane.f32.xlu0 %v1893
        %v1900 = vpop.xlane.xlu0 %1899
        %1901 = vadd.xlane.f32.xlu0 %v1894
        %v1902 = vpop.xlane.xlu0 %1901
        %v1903 = vmul.f32 %v1896, %v977
        %v1904 = vmul.f32 %v1898, %v977
        %v1905 = vmul.f32 %v1900, %v977
        %v1906 = vmul.f32 %v1902, %v977
        %v1907 = vsub.f32 %v1891, %v1903
        %v1908 = vsub.f32 %v1892, %v1904
        %v1909 = vsub.f32 %v1893, %v1905
        %v1910 = vsub.f32 %v1894, %v1906
        %v1911 = vmul.f32 %v1907, %v1907
        %v1912 = vmul.f32 %v1908, %v1908
        %v1913 = vmul.f32 %v1909, %v1909
        %v1914 = vmul.f32 %v1910, %v1910
        %1915 = vadd.xlane.f32.xlu0 %v1911
        %v1916 = vpop.xlane.xlu0 %1915
        %1917 = vadd.xlane.f32.xlu0 %v1912
        %v1918 = vpop.xlane.xlu0 %1917
        %1919 = vadd.xlane.f32.xlu0 %v1913
        %v1920 = vpop.xlane.xlu0 %1919
        %1921 = vadd.xlane.f32.xlu0 %v1914
        %v1922 = vpop.xlane.xlu0 %1921
        %v1923 = vmul.f32 %v1916, %v977
        %v1924 = vmul.f32 %v1918, %v977
        %v1925 = vmul.f32 %v1920, %v977
        %v1926 = vmul.f32 %v1922, %v977
        %v1927 = vadd.f32 %v1923, 1e-05
        %v1928 = vadd.f32 %v1924, 1e-05
        %v1929 = vadd.f32 %v1925, 1e-05
        %v1930 = vadd.f32 %v1926, 1e-05
        %v1931 = vrsqrt.pop %v1927
        %v1932 = vrsqrt.pop %v1928
        %v1933 = vrsqrt.pop %v1929
        %v1934 = vrsqrt.pop %v1930
        %v1935 = vmul.f32 %v1907, %v1931
        %v1936 = vmul.f32 %v1908, %v1932
        %v1937 = vmul.f32 %v1909, %v1933
        %v1938 = vmul.f32 %v1910, %v1934
        %v1940 = vlaneseq
        %v1941 = vshrl.u32 %v1940, 7
        %v1942 = vsub.s32 0, %v1941
        %v1943 = vrot.slane %v817, %v1942
        %v1945 = vmul.f32 %v1935, %v1943
        %v1946 = vmul.f32 %v1936, %v1943
        %v1947 = vmul.f32 %v1937, %v1943
        %v1948 = vmul.f32 %v1938, %v1943
        %v1950 = vlaneseq
        %v1951 = vshrl.u32 %v1950, 7
        %v1952 = vsub.s32 0, %v1951
        %v1953 = vrot.slane %v818, %v1952
        %v1955 = vadd.f32 %v1945, %v1953
        %v1956 = vadd.f32 %v1946, %v1953
        %v1957 = vadd.f32 %v1947, %v1953
        %v1958 = vadd.f32 %v1948, %v1953
        %v1959 = vpack.c.bf16 %v1956, %v1955
        %v1960 = vpack.c.bf16 %v1958, %v1957
        %v1962 = vlaneseq
        %v1963 = vshrl.u32 %v1962, 7
        %v1964 = vsub.s32 0, %v1963
        %v1965 = vrot.slane %v901, %v1964
        %v1966 = vlaneseq
        %v1967 = vshrl.u32 %v1966, 7
        %v1968 = vsub.s32 1, %v1967
        %v1969 = vrot.slane %v901, %v1968
        %v1970 = vlaneseq
        %v1971 = vshrl.u32 %v1970, 7
        %v1972 = vsub.s32 2, %v1971
        %v1973 = vrot.slane %v901, %v1972
        %v1974 = vlaneseq
        %v1975 = vshrl.u32 %v1974, 7
        %v1976 = vsub.s32 3, %v1975
        %v1977 = vrot.slane %v901, %v1976
        %v2014 = vunpack.c.l.b16 %v869
        %v2015 = vunpack.c.h.b16 %v869
        %v2016 = vunpack.c.l.b16 %v870
        %v2017 = vunpack.c.h.b16 %v870
        %v2018 = vunpack.c.l.b16 %v871
        %v2019 = vunpack.c.h.b16 %v871
        %v2020 = vunpack.c.l.b16 %v872
        %v2021 = vunpack.c.h.b16 %v872
        %v2022 = vunpack.c.l.b16 %v873
        %v2023 = vunpack.c.h.b16 %v873
        %v2024 = vunpack.c.l.b16 %v874
        %v2025 = vunpack.c.h.b16 %v874
        %v2026 = vunpack.c.l.b16 %v875
        %v2027 = vunpack.c.h.b16 %v875
        %v2028 = vunpack.c.l.b16 %v876
        %v2029 = vunpack.c.h.b16 %v876
        %v2030 = vunpack.c.l.b16 %v877
        %v2031 = vunpack.c.h.b16 %v877
        %v2032 = vunpack.c.l.b16 %v878
        %v2033 = vunpack.c.h.b16 %v878
        %v2034 = vunpack.c.l.b16 %v879
        %v2035 = vunpack.c.h.b16 %v879
        %v2036 = vunpack.c.l.b16 %v880
        %v2037 = vunpack.c.h.b16 %v880
        %v2038 = vunpack.c.l.b16 %v881
        %v2039 = vunpack.c.h.b16 %v881
        %v2040 = vunpack.c.l.b16 %v882
        %v2041 = vunpack.c.h.b16 %v882
        %v2042 = vunpack.c.l.b16 %v883
        %v2043 = vunpack.c.h.b16 %v883
        %v2044 = vunpack.c.l.b16 %v884
        %v2045 = vunpack.c.h.b16 %v884
        %v2046 = vunpack.c.l.b16 %v885
        %v2047 = vunpack.c.h.b16 %v885
        %v2048 = vunpack.c.l.b16 %v886
        %v2049 = vunpack.c.h.b16 %v886
        %v2050 = vunpack.c.l.b16 %v887
        %v2051 = vunpack.c.h.b16 %v887
        %v2052 = vunpack.c.l.b16 %v888
        %v2053 = vunpack.c.h.b16 %v888
        %v2054 = vunpack.c.l.b16 %v889
        %v2055 = vunpack.c.h.b16 %v889
        %v2056 = vunpack.c.l.b16 %v890
        %v2057 = vunpack.c.h.b16 %v890
        %v2058 = vunpack.c.l.b16 %v891
        %v2059 = vunpack.c.h.b16 %v891
        %v2060 = vunpack.c.l.b16 %v892
        %v2061 = vunpack.c.h.b16 %v892
        %v2062 = vunpack.c.l.b16 %v893
        %v2063 = vunpack.c.h.b16 %v893
        %v2064 = vunpack.c.l.b16 %v894
        %v2065 = vunpack.c.h.b16 %v894
        %v2066 = vunpack.c.l.b16 %v895
        %v2067 = vunpack.c.h.b16 %v895
        %v2068 = vunpack.c.l.b16 %v896
        %v2069 = vunpack.c.h.b16 %v896
        %v2070 = vunpack.c.l.b16 %v897
        %v2071 = vunpack.c.h.b16 %v897
        %v2072 = vunpack.c.l.b16 %v898
        %v2073 = vunpack.c.h.b16 %v898
        %v2074 = vunpack.c.l.b16 %v899
        %v2075 = vunpack.c.h.b16 %v899
        %v2076 = vunpack.c.l.b16 %v900
        %v2077 = vunpack.c.h.b16 %v900
        %v2078 = vpack.c.b16 %v2018, %v2014
        %v2079 = vpack.c.b16 %v2019, %v2015
        %v2080 = vpack.c.b16 %v2020, %v2016
        %v2081 = vpack.c.b16 %v2021, %v2017
        %v2082 = vpack.c.b16 %v2026, %v2022
        %v2083 = vpack.c.b16 %v2027, %v2023
        %v2084 = vpack.c.b16 %v2028, %v2024
        %v2085 = vpack.c.b16 %v2029, %v2025
        %v2086 = vpack.c.b16 %v2034, %v2030
        %v2087 = vpack.c.b16 %v2035, %v2031
        %v2088 = vpack.c.b16 %v2036, %v2032
        %v2089 = vpack.c.b16 %v2037, %v2033
        %v2090 = vpack.c.b16 %v2042, %v2038
        %v2091 = vpack.c.b16 %v2043, %v2039
        %v2092 = vpack.c.b16 %v2044, %v2040
        %v2093 = vpack.c.b16 %v2045, %v2041
        %v2094 = vpack.c.b16 %v2050, %v2046
        %v2095 = vpack.c.b16 %v2051, %v2047
        %v2096 = vpack.c.b16 %v2052, %v2048
        %v2097 = vpack.c.b16 %v2053, %v2049
        %v2098 = vpack.c.b16 %v2058, %v2054
        %v2099 = vpack.c.b16 %v2059, %v2055
        %v2100 = vpack.c.b16 %v2060, %v2056
        %v2101 = vpack.c.b16 %v2061, %v2057
        %v2102 = vpack.c.b16 %v2066, %v2062
        %v2103 = vpack.c.b16 %v2067, %v2063
        %v2104 = vpack.c.b16 %v2068, %v2064
        %v2105 = vpack.c.b16 %v2069, %v2065
        %v2106 = vpack.c.b16 %v2074, %v2070
        %v2107 = vpack.c.b16 %v2075, %v2071
        %v2108 = vpack.c.b16 %v2076, %v2072
        %v2109 = vpack.c.b16 %v2077, %v2073
        %2142 = vmatprep.subr.bf16.mxu0 %v2107
        %2143 = vmatpush1.bf16.msra.mxu0 %v2106
        %2144 = vmatprep.subr.bf16.mxu0 %v2103
        %2145 = vmatpush1.bf16.msra.mxu0 %v2102
        %2146 = vmatprep.subr.bf16.mxu0 %v2099
        %2147 = vmatpush1.bf16.msra.mxu0 %v2098
        %2148 = vmatprep.subr.bf16.mxu0 %v2095
        %2149 = vmatpush1.bf16.msra.mxu0 %v2094
        %2150 = vmatprep.subr.bf16.mxu0 %v2091
        %2151 = vmatpush1.bf16.msra.mxu0 %v2090
        %2152 = vmatprep.subr.bf16.mxu0 %v2087
        %2153 = vmatpush1.bf16.msra.mxu0 %v2086
        %2154 = vmatprep.subr.bf16.mxu0 %v2083
        %2155 = vmatpush1.bf16.msra.mxu0 %v2082
        %2156 = vmatprep.subr.bf16.mxu0 %v2079
        %2157 = vmatpush1.bf16.msra.mxu0 %v2078
        %2158 = vmatprep.subr.bf16.mxu0 0
        %2159 = vmatpush2.bf16.msra.mxu0 0
        %2160 = vmatprep.subr.bf16.mxu0 0
        %2161 = vmatpush2.bf16.msra.mxu0 0
        %2162 = vmatprep.subr.bf16.mxu0 0
        %2163 = vmatpush2.bf16.msra.mxu0 0
        %2164 = vmatprep.subr.bf16.mxu0 0
        %2165 = vmatpush2.bf16.msra.mxu0 0
        %2166 = vmatprep.subr.bf16.mxu0 0
        %2167 = vmatpush2.bf16.msra.mxu0 0
        %2168 = vmatprep.subr.bf16.mxu0 0
        %2169 = vmatpush2.bf16.msra.mxu0 0
        %2170 = vmatprep.subr.bf16.mxu0 0
        %2171 = vmatpush2.bf16.msra.mxu0 0
        %2172 = vmatprep.subr.bf16.mxu0 0
        %2173 = vmatpush2.bf16.msra.mxu0 0
        %2174 = vmatprep.mubr.bf16.mxu0 0
        %2175 = vmatmul.mubr.bf16.gmra.mxu0 %v1959
        %v2176 = vpop.f32.mrf.mxu0
        %v2177 = vadd.f32 %v1965, %v2176
        %v2178 = vpop.f32.mrf.mxu0
        %v2179 = vadd.f32 %v1969, %v2178
        %v2180 = vpop.f32.mrf.mxu0
        %v2181 = vadd.f32 %v1965, %v2180
        %v2182 = vpop.f32.mrf.mxu0
        %v2183 = vadd.f32 %v1969, %v2182
        %2184 = vmatprep.mubr.bf16.mxu0 0
        %2185 = vmatmul.mubr.bf16.gmra.mxu0 %v1960
        %v2186 = vpop.f32.mrf.mxu0
        %v2187 = vadd.f32 %v1965, %v2186
        %v2188 = vpop.f32.mrf.mxu0
        %v2189 = vadd.f32 %v1969, %v2188
        %v2190 = vpop.f32.mrf.mxu0
        %v2191 = vadd.f32 %v1965, %v2190
        %v2192 = vpop.f32.mrf.mxu0
        %v2193 = vadd.f32 %v1969, %v2192
        %2194 = vdwg.mxu0
        %2195 = vmatprep.subr.bf16.mxu0 %v2109
        %2196 = vmatpush1.bf16.msra.mxu0 %v2108
        %2197 = vmatprep.subr.bf16.mxu0 %v2105
        %2198 = vmatpush1.bf16.msra.mxu0 %v2104
        %2199 = vmatprep.subr.bf16.mxu0 %v2101
        %2200 = vmatpush1.bf16.msra.mxu0 %v2100
        %2201 = vmatprep.subr.bf16.mxu0 %v2097
        %2202 = vmatpush1.bf16.msra.mxu0 %v2096
        %2203 = vmatprep.subr.bf16.mxu0 %v2093
        %2204 = vmatpush1.bf16.msra.mxu0 %v2092
        %2205 = vmatprep.subr.bf16.mxu0 %v2089
        %2206 = vmatpush1.bf16.msra.mxu0 %v2088
        %2207 = vmatprep.subr.bf16.mxu0 %v2085
        %2208 = vmatpush1.bf16.msra.mxu0 %v2084
        %2209 = vmatprep.subr.bf16.mxu0 %v2081
        %2210 = vmatpush1.bf16.msra.mxu0 %v2080
        %2211 = vmatprep.subr.bf16.mxu0 0
        %2212 = vmatpush2.bf16.msra.mxu0 0
        %2213 = vmatprep.subr.bf16.mxu0 0
        %2214 = vmatpush2.bf16.msra.mxu0 0
        %2215 = vmatprep.subr.bf16.mxu0 0
        %2216 = vmatpush2.bf16.msra.mxu0 0
        %2217 = vmatprep.subr.bf16.mxu0 0
        %2218 = vmatpush2.bf16.msra.mxu0 0
        %2219 = vmatprep.subr.bf16.mxu0 0
        %2220 = vmatpush2.bf16.msra.mxu0 0
        %2221 = vmatprep.subr.bf16.mxu0 0
        %2222 = vmatpush2.bf16.msra.mxu0 0
        %2223 = vmatprep.subr.bf16.mxu0 0
        %2224 = vmatpush2.bf16.msra.mxu0 0
        %2225 = vmatprep.subr.bf16.mxu0 0
        %2226 = vmatpush2.bf16.msra.mxu0 0
        %2227 = vmatprep.mubr.bf16.mxu0 0
        %2228 = vmatmul.mubr.bf16.gmra.mxu0 %v1959
        %v2229 = vpop.f32.mrf.mxu0
        %v2230 = vadd.f32 %v1973, %v2229
        %v2231 = vpop.f32.mrf.mxu0
        %v2232 = vadd.f32 %v1977, %v2231
        %v2233 = vpop.f32.mrf.mxu0
        %v2234 = vadd.f32 %v1973, %v2233
        %v2235 = vpop.f32.mrf.mxu0
        %v2236 = vadd.f32 %v1977, %v2235
        %2237 = vmatprep.mubr.bf16.mxu0 0
        %2238 = vmatmul.mubr.bf16.gmra.mxu0 %v1960
        %v2239 = vpop.f32.mrf.mxu0
        %v2240 = vadd.f32 %v1973, %v2239
        %v2241 = vpop.f32.mrf.mxu0
        %v2242 = vadd.f32 %v1977, %v2241
        %v2243 = vpop.f32.mrf.mxu0
        %v2244 = vadd.f32 %v1973, %v2243
        %v2245 = vpop.f32.mrf.mxu0
        %v2246 = vadd.f32 %v1977, %v2245
        %2247 = vdwg.mxu0
        %v2248 = vmul.f32 %v2177, 1.702
        %v2249 = vmul.f32 %v2179, 1.702
        %v2250 = vmul.f32 %v2230, 1.702
        %v2251 = vmul.f32 %v2232, 1.702
        %v2252 = vmul.f32 %v2181, 1.702
        %v2253 = vmul.f32 %v2183, 1.702
        %v2254 = vmul.f32 %v2234, 1.702
        %v2255 = vmul.f32 %v2236, 1.702
        %v2256 = vmul.f32 %v2187, 1.702
        %v2257 = vmul.f32 %v2189, 1.702
        %v2258 = vmul.f32 %v2240, 1.702
        %v2259 = vmul.f32 %v2242, 1.702
        %v2260 = vmul.f32 %v2191, 1.702
        %v2261 = vmul.f32 %v2193, 1.702
        %v2262 = vmul.f32 %v2244, 1.702
        %v2263 = vmul.f32 %v2246, 1.702
        %v2264 = vxor.u32 %v2248, 2147483648
        %v2265 = vxor.u32 %v2249, 2147483648
        %v2266 = vxor.u32 %v2250, 2147483648
        %v2267 = vxor.u32 %v2251, 2147483648
        %v2268 = vxor.u32 %v2252, 2147483648
        %v2269 = vxor.u32 %v2253, 2147483648
        %v2270 = vxor.u32 %v2254, 2147483648
        %v2271 = vxor.u32 %v2255, 2147483648
        %v2272 = vxor.u32 %v2256, 2147483648
        %v2273 = vxor.u32 %v2257, 2147483648
        %v2274 = vxor.u32 %v2258, 2147483648
        %v2275 = vxor.u32 %v2259, 2147483648
        %v2276 = vxor.u32 %v2260, 2147483648
        %v2277 = vxor.u32 %v2261, 2147483648
        %v2278 = vxor.u32 %v2262, 2147483648
        %v2279 = vxor.u32 %v2263, 2147483648
        %v2280 = vmul.f32 %v2264, 1.442695
        %v2281 = vpow.pop %v2280
        %v2282 = vmul.f32 %v2265, 1.442695
        %v2283 = vpow.pop %v2282
        %v2284 = vmul.f32 %v2266, 1.442695
        %v2285 = vpow.pop %v2284
        %v2286 = vmul.f32 %v2267, 1.442695
        %v2287 = vpow.pop %v2286
        %v2288 = vmul.f32 %v2268, 1.442695
        %v2289 = vpow.pop %v2288
        %v2290 = vmul.f32 %v2269, 1.442695
        %v2291 = vpow.pop %v2290
        %v2292 = vmul.f32 %v2270, 1.442695
        %v2293 = vpow.pop %v2292
        %v2294 = vmul.f32 %v2271, 1.442695
        %v2295 = vpow.pop %v2294
        %v2296 = vmul.f32 %v2272, 1.442695
        %v2297 = vpow.pop %v2296
        %v2298 = vmul.f32 %v2273, 1.442695
        %v2299 = vpow.pop %v2298
        %v2300 = vmul.f32 %v2274, 1.442695
        %v2301 = vpow.pop %v2300
        %v2302 = vmul.f32 %v2275, 1.442695
        %v2303 = vpow.pop %v2302
        %v2304 = vmul.f32 %v2276, 1.442695
        %v2305 = vpow.pop %v2304
        %v2306 = vmul.f32 %v2277, 1.442695
        %v2307 = vpow.pop %v2306
        %v2308 = vmul.f32 %v2278, 1.442695
        %v2309 = vpow.pop %v2308
        %v2310 = vmul.f32 %v2279, 1.442695
        %v2311 = vpow.pop %v2310
        %v2312 = vadd.f32 %v2281, 1.0
        %v2313 = vadd.f32 %v2283, 1.0
        %v2314 = vadd.f32 %v2285, 1.0
        %v2315 = vadd.f32 %v2287, 1.0
        %v2316 = vadd.f32 %v2289, 1.0
        %v2317 = vadd.f32 %v2291, 1.0
        %v2318 = vadd.f32 %v2293, 1.0
        %v2319 = vadd.f32 %v2295, 1.0
        %v2320 = vadd.f32 %v2297, 1.0
        %v2321 = vadd.f32 %v2299, 1.0
        %v2322 = vadd.f32 %v2301, 1.0
        %v2323 = vadd.f32 %v2303, 1.0
        %v2324 = vadd.f32 %v2305, 1.0
        %v2325 = vadd.f32 %v2307, 1.0
        %v2326 = vadd.f32 %v2309, 1.0
        %v2327 = vadd.f32 %v2311, 1.0
        %v2328 = vrcp.pop %v2312
        %v2329 = vmul.f32 1.0, %v2328
        %v2330 = vrcp.pop %v2313
        %v2331 = vmul.f32 1.0, %v2330
        %v2332 = vrcp.pop %v2314
        %v2333 = vmul.f32 1.0, %v2332
        %v2334 = vrcp.pop %v2315
        %v2335 = vmul.f32 1.0, %v2334
        %v2336 = vrcp.pop %v2316
        %v2337 = vmul.f32 1.0, %v2336
        %v2338 = vrcp.pop %v2317
        %v2339 = vmul.f32 1.0, %v2338
        %v2340 = vrcp.pop %v2318
        %v2341 = vmul.f32 1.0, %v2340
        %v2342 = vrcp.pop %v2319
        %v2343 = vmul.f32 1.0, %v2342
        %v2344 = vrcp.pop %v2320
        %v2345 = vmul.f32 1.0, %v2344
        %v2346 = vrcp.pop %v2321
        %v2347 = vmul.f32 1.0, %v2346
        %v2348 = vrcp.pop %v2322
        %v2349 = vmul.f32 1.0, %v2348
        %v2350 = vrcp.pop %v2323
        %v2351 = vmul.f32 1.0, %v2350
        %v2352 = vrcp.pop %v2324
        %v2353 = vmul.f32 1.0, %v2352
        %v2354 = vrcp.pop %v2325
        %v2355 = vmul.f32 1.0, %v2354
        %v2356 = vrcp.pop %v2326
        %v2357 = vmul.f32 1.0, %v2356
        %v2358 = vrcp.pop %v2327
        %v2359 = vmul.f32 1.0, %v2358
        %v2360 = vmul.f32 %v2177, %v2329
        %v2361 = vmul.f32 %v2179, %v2331
        %v2362 = vmul.f32 %v2230, %v2333
        %v2363 = vmul.f32 %v2232, %v2335
        %v2364 = vmul.f32 %v2181, %v2337
        %v2365 = vmul.f32 %v2183, %v2339
        %v2366 = vmul.f32 %v2234, %v2341
        %v2367 = vmul.f32 %v2236, %v2343
        %v2368 = vmul.f32 %v2187, %v2345
        %v2369 = vmul.f32 %v2189, %v2347
        %v2370 = vmul.f32 %v2240, %v2349
        %v2371 = vmul.f32 %v2242, %v2351
        %v2372 = vmul.f32 %v2191, %v2353
        %v2373 = vmul.f32 %v2193, %v2355
        %v2374 = vmul.f32 %v2244, %v2357
        %v2375 = vmul.f32 %v2246, %v2359
        %v2376 = vpack.c.bf16 %v2364, %v2360
        %v2377 = vpack.c.bf16 %v2365, %v2361
        %v2378 = vpack.c.bf16 %v2366, %v2362
        %v2379 = vpack.c.bf16 %v2367, %v2363
        %v2380 = vpack.c.bf16 %v2372, %v2368
        %v2381 = vpack.c.bf16 %v2373, %v2369
        %v2382 = vpack.c.bf16 %v2374, %v2370
        %v2383 = vpack.c.bf16 %v2375, %v2371
        %v2385 = vlaneseq
        %v2386 = vshrl.u32 %v2385, 7
        %v2387 = vsub.s32 0, %v2386
        %v2388 = vrot.slane %v966, %v2387
        %v2454 = vunpack.c.l.b16 %v902
        %v2455 = vunpack.c.l.b16 %v903
        %v2456 = vunpack.c.l.b16 %v904
        %v2457 = vunpack.c.l.b16 %v905
        %v2458 = vunpack.c.l.b16 %v906
        %v2459 = vunpack.c.l.b16 %v907
        %v2460 = vunpack.c.l.b16 %v908
        %v2461 = vunpack.c.l.b16 %v909
        %v2462 = vunpack.c.l.b16 %v910
        %v2463 = vunpack.c.l.b16 %v911
        %v2464 = vunpack.c.l.b16 %v912
        %v2465 = vunpack.c.l.b16 %v913
        %v2466 = vunpack.c.l.b16 %v914
        %v2467 = vunpack.c.l.b16 %v915
        %v2468 = vunpack.c.l.b16 %v916
        %v2469 = vunpack.c.l.b16 %v917
        %v2470 = vunpack.c.l.b16 %v918
        %v2471 = vunpack.c.l.b16 %v919
        %v2472 = vunpack.c.l.b16 %v920
        %v2473 = vunpack.c.l.b16 %v921
        %v2474 = vunpack.c.l.b16 %v922
        %v2475 = vunpack.c.l.b16 %v923
        %v2476 = vunpack.c.l.b16 %v924
        %v2477 = vunpack.c.l.b16 %v925
        %v2478 = vunpack.c.l.b16 %v926
        %v2479 = vunpack.c.l.b16 %v927
        %v2480 = vunpack.c.l.b16 %v928
        %v2481 = vunpack.c.l.b16 %v929
        %v2482 = vunpack.c.l.b16 %v930
        %v2483 = vunpack.c.l.b16 %v931
        %v2484 = vunpack.c.l.b16 %v932
        %v2485 = vunpack.c.l.b16 %v933
        %v2486 = vunpack.c.l.b16 %v934
        %v2487 = vunpack.c.l.b16 %v935
        %v2488 = vunpack.c.l.b16 %v936
        %v2489 = vunpack.c.l.b16 %v937
        %v2490 = vunpack.c.l.b16 %v938
        %v2491 = vunpack.c.l.b16 %v939
        %v2492 = vunpack.c.l.b16 %v940
        %v2493 = vunpack.c.l.b16 %v941
        %v2494 = vunpack.c.l.b16 %v942
        %v2495 = vunpack.c.l.b16 %v943
        %v2496 = vunpack.c.l.b16 %v944
        %v2497 = vunpack.c.l.b16 %v945
        %v2498 = vunpack.c.l.b16 %v946
        %v2499 = vunpack.c.l.b16 %v947
        %v2500 = vunpack.c.l.b16 %v948
        %v2501 = vunpack.c.l.b16 %v949
        %v2502 = vunpack.c.l.b16 %v950
        %v2503 = vunpack.c.l.b16 %v951
        %v2504 = vunpack.c.l.b16 %v952
        %v2505 = vunpack.c.l.b16 %v953
        %v2506 = vunpack.c.l.b16 %v954
        %v2507 = vunpack.c.l.b16 %v955
        %v2508 = vunpack.c.l.b16 %v956
        %v2509 = vunpack.c.l.b16 %v957
        %v2510 = vunpack.c.l.b16 %v958
        %v2511 = vunpack.c.l.b16 %v959
        %v2512 = vunpack.c.l.b16 %v960
        %v2513 = vunpack.c.l.b16 %v961
        %v2514 = vunpack.c.l.b16 %v962
        %v2515 = vunpack.c.l.b16 %v963
        %v2516 = vunpack.c.l.b16 %v964
        %v2517 = vunpack.c.l.b16 %v965
        %v2518 = vpack.c.b16 %v2455, %v2454
        %v2519 = vpack.c.b16 %v2457, %v2456
        %v2520 = vpack.c.b16 %v2459, %v2458
        %v2521 = vpack.c.b16 %v2461, %v2460
        %v2522 = vpack.c.b16 %v2463, %v2462
        %v2523 = vpack.c.b16 %v2465, %v2464
        %v2524 = vpack.c.b16 %v2467, %v2466
        %v2525 = vpack.c.b16 %v2469, %v2468
        %v2526 = vpack.c.b16 %v2471, %v2470
        %v2527 = vpack.c.b16 %v2473, %v2472
        %v2528 = vpack.c.b16 %v2475, %v2474
        %v2529 = vpack.c.b16 %v2477, %v2476
        %v2530 = vpack.c.b16 %v2479, %v2478
        %v2531 = vpack.c.b16 %v2481, %v2480
        %v2532 = vpack.c.b16 %v2483, %v2482
        %v2533 = vpack.c.b16 %v2485, %v2484
        %v2534 = vpack.c.b16 %v2487, %v2486
        %v2535 = vpack.c.b16 %v2489, %v2488
        %v2536 = vpack.c.b16 %v2491, %v2490
        %v2537 = vpack.c.b16 %v2493, %v2492
        %v2538 = vpack.c.b16 %v2495, %v2494
        %v2539 = vpack.c.b16 %v2497, %v2496
        %v2540 = vpack.c.b16 %v2499, %v2498
        %v2541 = vpack.c.b16 %v2501, %v2500
        %v2542 = vpack.c.b16 %v2503, %v2502
        %v2543 = vpack.c.b16 %v2505, %v2504
        %v2544 = vpack.c.b16 %v2507, %v2506
        %v2545 = vpack.c.b16 %v2509, %v2508
        %v2546 = vpack.c.b16 %v2511, %v2510
        %v2547 = vpack.c.b16 %v2513, %v2512
        %v2548 = vpack.c.b16 %v2515, %v2514
        %v2549 = vpack.c.b16 %v2517, %v2516
        %2582 = vmatprep.subr.bf16.mxu0 0
        %2583 = vmatpush1.bf16.msra.mxu0 %v2525
        %2584 = vmatprep.subr.bf16.mxu0 0
        %2585 = vmatpush1.bf16.msra.mxu0 %v2524
        %2586 = vmatprep.subr.bf16.mxu0 0
        %2587 = vmatpush1.bf16.msra.mxu0 %v2523
        %2588 = vmatprep.subr.bf16.mxu0 0
        %2589 = vmatpush1.bf16.msra.mxu0 %v2522
        %2590 = vmatprep.subr.bf16.mxu0 0
        %2591 = vmatpush1.bf16.msra.mxu0 %v2521
        %2592 = vmatprep.subr.bf16.mxu0 0
        %2593 = vmatpush1.bf16.msra.mxu0 %v2520
        %2594 = vmatprep.subr.bf16.mxu0 0
        %2595 = vmatpush1.bf16.msra.mxu0 %v2519
        %2596 = vmatprep.subr.bf16.mxu0 0
        %2597 = vmatpush1.bf16.msra.mxu0 %v2518
        %2598 = vmatprep.subr.bf16.mxu0 0
        %2599 = vmatpush2.bf16.msra.mxu0 %v2533
        %2600 = vmatprep.subr.bf16.mxu0 0
        %2601 = vmatpush2.bf16.msra.mxu0 %v2532
        %2602 = vmatprep.subr.bf16.mxu0 0
        %2603 = vmatpush2.bf16.msra.mxu0 %v2531
        %2604 = vmatprep.subr.bf16.mxu0 0
        %2605 = vmatpush2.bf16.msra.mxu0 %v2530
        %2606 = vmatprep.subr.bf16.mxu0 0
        %2607 = vmatpush2.bf16.msra.mxu0 %v2529
        %2608 = vmatprep.subr.bf16.mxu0 0
        %2609 = vmatpush2.bf16.msra.mxu0 %v2528
        %2610 = vmatprep.subr.bf16.mxu0 0
        %2611 = vmatpush2.bf16.msra.mxu0 %v2527
        %2612 = vmatprep.subr.bf16.mxu0 0
        %2613 = vmatpush2.bf16.msra.mxu0 %v2526
        %2614 = vmatprep.mubr.bf16.mxu0 %v2377
        %2615 = vmatmul.mubr.bf16.gmra.mxu0 %v2376
        %v2616 = vpop.f32.mrf.mxu0
        %v2617 = vadd.f32 %v2388, %v2616
        %v2618 = vpop.f32.mrf.mxu0
        %v2619 = vpop.f32.mrf.mxu0
        %v2620 = vadd.f32 %v2388, %v2619
        %v2621 = vpop.f32.mrf.mxu0
        %2622 = vmatprep.mubr.bf16.mxu0 %v2381
        %2623 = vmatmul.mubr.bf16.gmra.mxu0 %v2380
        %v2624 = vpop.f32.mrf.mxu0
        %v2625 = vadd.f32 %v2388, %v2624
        %v2626 = vpop.f32.mrf.mxu0
        %v2627 = vpop.f32.mrf.mxu0
        %v2628 = vadd.f32 %v2388, %v2627
        %v2629 = vpop.f32.mrf.mxu0
        %2630 = vdwg.mxu0
        %2631 = vmatprep.subr.bf16.mxu0 0
        %2632 = vmatpush1.bf16.msra.mxu0 %v2541
        %2633 = vmatprep.subr.bf16.mxu0 0
        %2634 = vmatpush1.bf16.msra.mxu0 %v2540
        %2635 = vmatprep.subr.bf16.mxu0 0
        %2636 = vmatpush1.bf16.msra.mxu0 %v2539
        %2637 = vmatprep.subr.bf16.mxu0 0
        %2638 = vmatpush1.bf16.msra.mxu0 %v2538
        %2639 = vmatprep.subr.bf16.mxu0 0
        %2640 = vmatpush1.bf16.msra.mxu0 %v2537
        %2641 = vmatprep.subr.bf16.mxu0 0
        %2642 = vmatpush1.bf16.msra.mxu0 %v2536
        %2643 = vmatprep.subr.bf16.mxu0 0
        %2644 = vmatpush1.bf16.msra.mxu0 %v2535
        %2645 = vmatprep.subr.bf16.mxu0 0
        %2646 = vmatpush1.bf16.msra.mxu0 %v2534
        %2647 = vmatprep.subr.bf16.mxu0 0
        %2648 = vmatpush2.bf16.msra.mxu0 %v2549
        %2649 = vmatprep.subr.bf16.mxu0 0
        %2650 = vmatpush2.bf16.msra.mxu0 %v2548
        %2651 = vmatprep.subr.bf16.mxu0 0
        %2652 = vmatpush2.bf16.msra.mxu0 %v2547
        %2653 = vmatprep.subr.bf16.mxu0 0
        %2654 = vmatpush2.bf16.msra.mxu0 %v2546
        %2655 = vmatprep.subr.bf16.mxu0 0
        %2656 = vmatpush2.bf16.msra.mxu0 %v2545
        %2657 = vmatprep.subr.bf16.mxu0 0
        %2658 = vmatpush2.bf16.msra.mxu0 %v2544
        %2659 = vmatprep.subr.bf16.mxu0 0
        %2660 = vmatpush2.bf16.msra.mxu0 %v2543
        %2661 = vmatprep.subr.bf16.mxu0 0
        %2662 = vmatpush2.bf16.msra.mxu0 %v2542
        %2663 = vmatprep.mubr.bf16.mxu0 %v2379
        %2664 = vmatmul.mubr.bf16.gmra.mxu0 %v2378
        %v2665 = vpop.f32.mrf.mxu0
        %v2666 = vadd.f32 %v2617, %v2665
        %v2667 = vpop.f32.mrf.mxu0
        %v2668 = vpop.f32.mrf.mxu0
        %v2669 = vadd.f32 %v2620, %v2668
        %v2670 = vpop.f32.mrf.mxu0
        %2671 = vmatprep.mubr.bf16.mxu0 %v2383
        %2672 = vmatmul.mubr.bf16.gmra.mxu0 %v2382
        %v2673 = vpop.f32.mrf.mxu0
        %v2674 = vadd.f32 %v2625, %v2673
        %v2675 = vpop.f32.mrf.mxu0
        %v2676 = vpop.f32.mrf.mxu0
        %v2677 = vadd.f32 %v2628, %v2676
        %v2678 = vpop.f32.mrf.mxu0
        %2679 = vdwg.mxu0
        %v2680 = vadd.f32 %v1891, %v2666
        %v2681 = vadd.f32 %v1892, %v2669
        %v2682 = vadd.f32 %v1893, %v2674
        %v2683 = vadd.f32 %v1894, %v2677
        %p2684 = scmp.lt.s32.totalorder %s28, 1
        // Predicated region
        $region121: #{tpu_custom_call.1} parent=75 // pred_check
          %p2685 = pneg %p2684
        $region122: #{tpu_custom_call.1} parent=75 // pred_check_branch
          %2687 = sbr.rel (%p2685) target = $region124
        $region123: #{tpu_custom_call.1} parent=75 // pred_region
          %2688 = vst [vmem:[#allocation15] sm:$0xff] %v2680
          %2689 = vst [vmem:[#allocation15 + $0x8] sm:$0xff] %v2681
          %2690 = vst [vmem:[#allocation15 + $0x10] sm:$0xff] %v2682
          %2691 = vst [vmem:[#allocation15 + $0x18] sm:$0xff] %v2683
        $region124: #{tpu_custom_call.1} parent=75 // pred_fallthru
          _
        %p2692 = scmp.eq.s32.totalorder %s28, 1
        // Predicated region
        $region125: #{tpu_custom_call.1} parent=75 // pred_check
          %p2693 = pneg %p2692
        $region126: #{tpu_custom_call.1} parent=75 // pred_check_branch
          %2695 = sbr.rel (%p2693) target = $region128
        $region127: #{tpu_custom_call.1} parent=75 // pred_region
          %v2696 = vmul.f32 %v2680, %v2680
          %v2697 = vmul.f32 %v2681, %v2681
          %v2698 = vmul.f32 %v2682, %v2682
          %v2699 = vmul.f32 %v2683, %v2683
          %2700 = vadd.xlane.f32.xlu0 %v2696
          %v2701 = vpop.xlane.xlu0 %2700
          %2702 = vadd.xlane.f32.xlu0 %v2697
          %v2703 = vpop.xlane.xlu0 %2702
          %2704 = vadd.xlane.f32.xlu0 %v2698
          %v2705 = vpop.xlane.xlu0 %2704
          %2706 = vadd.xlane.f32.xlu0 %v2699
          %v2707 = vpop.xlane.xlu0 %2706
          %v2708 = vmax.f32 %v2701, 1e-12
          %v2709 = vmax.f32 %v2703, 1e-12
          %v2710 = vmax.f32 %v2705, 1e-12
          %v2711 = vmax.f32 %v2707, 1e-12
          %v2712 = vrsqrt.pop %v2708
          %v2713 = vrsqrt.pop %v2709
          %v2714 = vrsqrt.pop %v2710
          %v2715 = vrsqrt.pop %v2711
          %v2716 = vmul.f32 %v2680, %v2712
          %v2717 = vmul.f32 %v2681, %v2713
          %v2718 = vmul.f32 %v2682, %v2714
          %v2719 = vmul.f32 %v2683, %v2715
          %2720 = vst [vmem:[#allocation15] sm:$0xff] %v2716
          %2721 = vst [vmem:[#allocation15 + $0x8] sm:$0xff] %v2717
          %2722 = vst [vmem:[#allocation15 + $0x10] sm:$0xff] %v2718
          %2723 = vst [vmem:[#allocation15 + $0x18] sm:$0xff] %v2719
        $region128: #{tpu_custom_call.1} parent=75 // pred_fallthru
          _
        // Predicated region
        $region129: #{tpu_custom_call.1} parent=75 // pred_check
          %p2724 = pneg %p395
        $region130: #{tpu_custom_call.1} parent=75 // pred_check_branch
          %2726 = sbr.rel (%p2724) target = $region132
        $region131: #{tpu_custom_call.1} parent=75 // pred_region
          %s2728 = ssub.s32 512, 512
          %2729 = vsyncadd [#allocation4], %s2728
          %s2730 = sshll.u32 [#allocation15], 4
          %s2731 = int_to_ptr.vmem [resolvable:$true] %s2730
          %2736 = dma.vmem_to_hbm [thread:$0]  %s2731, 512, %s14, [#allocation4], 128, 128, 8
        $region132: #{tpu_custom_call.1} parent=75 // pred_fallthru
          _
        // Predicated region
        $region133: #{tpu_custom_call.1} parent=75 // pred_check
          %p2737 = pneg %p395
        $region134: #{tpu_custom_call.1} parent=75 // pred_check_branch
          %2739 = sbr.rel (%p2737) target = $region136
        $region135: #{tpu_custom_call.1} parent=75 // pred_region
          %2740 = dma.done [#allocation4], 512
        $region136: #{tpu_custom_call.1} parent=75 // pred_fallthru
          _
      $region76: #{tpu_custom_call.1} parent=5 // pred_fallthru
        _
      %p2741 = scmp.le.s32.totalorder 2, %s23
      // Predicated region
      $region137: #{tpu_custom_call.1} parent=5 // pred_check
        %p2742 = pneg %p2741
      $region138: #{tpu_custom_call.1} parent=5 // pred_check_branch
        %2744 = sbr.rel (%p2742) target = $region140
      $region139: #{tpu_custom_call.1} parent=5 // pred_region
        %s2745 = ssub.s32 %s23, 2
      $region140: #{tpu_custom_call.1} parent=5 // pred_fallthru
        _
    $region6: #{tpu_custom_call.1} parent=1 // loop_footer
      %s27 = sadd.s32 1, %s23
    $region7: #{tpu_custom_call.1} parent=1 // loop_footer_branch
      %22 = sbr.rel target = $region3
    $region8: #{tpu_custom_call.1} parent=1 // loop_exit
      _
    %2746 = vsyncpa [#allocation3], 1
    %s2747 = scalar_lea.sflag [#allocation3], 1
    %2748 = vsyncpa %s2747, 1
    %2749 = vsyncpa [#allocation6], 1
    %2750 = vsyncpa [#allocation4], 1
    %s2751 = scalar_lea.sflag [#allocation4], 1
    %2752 = vsyncpa %s2751, 1

</llo_original>
